<compile_context>
chip_gen: v7x
topology: tpu7x:2x2x1
jax: 0.10.0
libtpu: 0.0.40
codegen_flags: <defaults>
</compile_context>

<pallas_src>
import functools

import numpy as np

import jax
import jax.numpy as jnp
from jax.experimental import pallas as pl
from jax.experimental.pallas import tpu as pltpu


# --------------------------------------------------------------------------
# Kernel bodies
# --------------------------------------------------------------------------
def _reorg_kernel_strided(x_ref, o_ref, *, stride: int, width: int):
    # x_ref: (Cb, Hb, s*W)  -- for each output row h, the s row-phase input
    #                          rows lie back-to-back along the lane dim.
    # o_ref: (s*s, Cb, Hb, Wo)
    #
    # Each (i, j) phase is one static strided lane window: a single load that
    # is already in the (Cb, Hb, Wo) store layout -- no reshape relayouts.
    s, w = stride, width
    wo = w // s
    for i in range(s):
        for j in range(s):
            o_ref[i * s + j] = x_ref[:, :, pl.ds(i * w + j, wo, stride=s)]


def _reorg_kernel_reshape(x_ref, o_ref, *, stride: int, width: int):
    # Fallback path (used only if lane-strided ds loads don't lower on this
    # backend/jax build): contiguous row-phase lane window + in-register
    # minor-dim split.  Known-good lowering (previous revision).
    s, w = stride, width
    cb, hb, _ = x_ref.shape
    wo = w // s
    for i in range(s):
        xi = x_ref[:, :, pl.ds(i * w, w)]          # (Cb, Hb, W)
        xir = xi.reshape(cb, hb, wo, s)            # split lanes W -> (Wo, s)
        for j in range(s):
            o_ref[i * s + j] = xir[:, :, :, j]     # (Cb, Hb, Wo)


# --------------------------------------------------------------------------
# Static helpers (run in Python, outside any trace)
# --------------------------------------------------------------------------
@functools.lru_cache(maxsize=None)
def _vmem_capacity_bytes() -> int:
    """Physical VMEM per TensorCore; conservative (v7x-safe) default if unknown."""
    try:
        info = pltpu.get_tpu_info()
        cap = int(getattr(info, "vmem_capacity_bytes", 64 * 1024 * 1024))
        return cap if cap > 0 else 64 * 1024 * 1024
    except Exception:
        return 64 * 1024 * 1024


@functools.lru_cache(maxsize=None)
def _strided_path_ok(stride: int, width: int, dtype_name: str) -> bool:
    """True iff the lane-strided pl.ds deinterleave lowers AND is exact on this
    backend for this (stride, W, dtype).  Otherwise the reshape fallback is used."""
    s, w = stride, width
    wo = w // s
    cb, hb = 2, 8
    try:
        dtype = jnp.dtype(dtype_name)
        xs = (np.arange(cb * hb * s * w) % 61).astype(dtype).reshape(cb, hb, s * w)
        kernel = functools.partial(_reorg_kernel_strided, stride=s, width=w)
        out = pl.pallas_call(
            kernel,
            out_shape=jax.ShapeDtypeStruct((s * s, cb, hb, wo), dtype),
        )(jnp.asarray(xs))
        out = np.asarray(jax.block_until_ready(out))
        for i in range(s):
            for j in range(s):
                ref = xs[:, :, i * w + j:: s][:, :, :wo]
                if not np.array_equal(out[i * s + j], ref):
                    return False
        return True
    except Exception:
        return False


def _pick_block(extent: int, bytes_per_unit: int, budget: int, align: int = 1) -> int:
    """Largest divisor of `extent` (the full extent, or a multiple of `align`)
    whose block fits `budget`; if nothing fits, the smallest valid divisor."""
    best_small = extent
    for d in range(extent, 0, -1):
        if extent % d:
            continue
        if d != extent and align > 1 and d % align:
            continue
        best_small = d
        if d * bytes_per_unit <= budget:
            return d
    return best_small


def _largest_divisor_at_most(n: int, cap: int, align: int = 1):
    for d in range(min(cap, n), 0, -1):
        if n % d:
            continue
        if align > 1 and d % align:
            continue
        return d
    return None


# --------------------------------------------------------------------------
# pallas_call wrapper
# --------------------------------------------------------------------------
@functools.partial(
    jax.jit,
    static_argnames=("stride", "c_blk", "h_blk", "use_strided", "vmem_limit"),
)
def _reorg_impl(x, *, stride, c_blk, h_blk, use_strided, vmem_limit):
    B, C, H, W = x.shape
    s = stride
    Ho, Wo = H // s, W // s
    itemsize = jnp.dtype(x.dtype).itemsize

    # Free, contiguous reshape: row phase folded into the lane dim, so the
    # input block is lane-dense (s*W lanes) with dense sublanes (Ho rows).
    x_r = x.reshape(B, C, Ho, s * W)

    body = _reorg_kernel_strided if use_strided else _reorg_kernel_reshape
    kernel = functools.partial(body, stride=s, width=W)

    out = pl.pallas_call(
        kernel,
        out_shape=jax.ShapeDtypeStruct((B, s * s, C, Ho, Wo), x.dtype),
        grid=(B, C // c_blk, Ho // h_blk),
        in_specs=[
            pl.BlockSpec((None, c_blk, h_blk, s * W),
                         lambda b, cb, hb: (b, cb, hb, 0)),
        ],
        out_specs=pl.BlockSpec((None, s * s, c_blk, h_blk, Wo),
                               lambda b, cb, hb: (b, 0, cb, hb, 0)),
        compiler_params=pltpu.CompilerParams(
            dimension_semantics=("parallel", "parallel", "parallel"),
            vmem_limit_bytes=int(vmem_limit),
        ),
        cost_estimate=pl.CostEstimate(
            flops=0,
            transcendentals=0,
            bytes_accessed=2 * x.size * itemsize,
        ),
    )(x_r)

    # Free, contiguous reshape back to the PyTorch output layout.
    return out.reshape(B, s * s * C, Ho, Wo)


def reorg(x: jax.Array, stride: int = 2) -> jax.Array:
    assert x.ndim == 4
    B, C, H, W = x.shape
    s = int(stride)
    assert H % s == 0 and W % s == 0
    Ho, Wo = H // s, W // s
    itemsize = jnp.dtype(x.dtype).itemsize

    # dtype-aware sublane packing: f32 -> 8, bf16/f16 -> 16, int8/fp8 -> 32.
    sub_align = max(8, 32 // itemsize)

    # Generation-aware VMEM budgeting.  Pipelined footprint is
    # 2 buffers x (in_block + out_block) = 4 x block_bytes (in == out bytes).
    vmem_cap = _vmem_capacity_bytes()
    pipeline_budget = min((vmem_cap * 3) // 4, 64 * 1024 * 1024)  # ~48 MiB on v7x
    per_block_budget = pipeline_budget // 4                       # 12-16 MiB blocks

    c_blk = _pick_block(C, Ho * s * W * itemsize, per_block_budget)
    h_blk = Ho
    if c_blk * Ho * s * W * itemsize > per_block_budget:
        # Even one channel is too large -> additionally tile Ho with
        # dtype-aware sublane alignment.
        h_blk = _pick_block(Ho, c_blk * s * W * itemsize, per_block_budget,
                            align=sub_align)

    # v7x megacore: guarantee >= 2 parallel grid steps when the whole array
    # would otherwise be a single block (and it's big enough to matter).
    if (B * (C // c_blk) * (Ho // h_blk) == 1
            and x.size * itemsize >= (1 << 20)):
        d = _largest_divisor_at_most(C, C // 2) if C > 1 else None
        if d:
            c_blk = d
        else:
            d = _largest_divisor_at_most(Ho, Ho // 2, align=sub_align)
            if d:
                h_blk = d

    # Derive the scoped VMEM limit from the actual pipelined footprint, so an
    # oversized fallback block can never exceed the limit we request.
    block_bytes = c_blk * h_blk * s * W * itemsize
    footprint = 4 * block_bytes
    vmem_limit = min(max(footprint + (8 << 20), 32 << 20), vmem_cap)

    use_strided = _strided_path_ok(s, W, jnp.dtype(x.dtype).name)

    return _reorg_impl(x, stride=s, c_blk=c_blk, h_blk=h_blk,
                       use_strided=use_strided, vmem_limit=vmem_limit)


# --------------------------------------------------------------------------
# Pure-JAX reference (replicates the PyTorch view/transpose chain)
# --------------------------------------------------------------------------
def reorg_reference(x: jax.Array, stride: int = 2) -> jax.Array:
    B, C, H, W = x.shape
    s = stride
    y = x.reshape(B, C, H // s, s, W // s, s)
    y = jnp.transpose(y, (0, 1, 2, 4, 3, 5))          # (B, C, H/s, W/s, s, s)
    y = y.reshape(B, C, (H // s) * (W // s), s * s)
    y = jnp.transpose(y, (0, 1, 3, 2))                # (B, C, s*s, H/s*W/s)
    y = y.reshape(B, C, s * s, H // s, W // s)
    y = jnp.transpose(y, (0, 2, 1, 3, 4))             # (B, s*s, C, H/s, W/s)
    return y.reshape(B, s * s * C, H // s, W // s)


if __name__ == "__main__":
    key = jax.random.PRNGKey(0)

    # Primary test (shapes consistent with the module).
    B, C, H, W = 2, 4, 16, 16
    x = jax.random.normal(key, (B, C, H, W), dtype=jnp.float32)
    out = reorg(x, stride=2)
    jax.block_until_ready(out)
    ref = reorg_reference(x, stride=2)
    assert out.shape == (B, 4 * C, H // 2, W // 2), out.shape
    assert out.dtype == x.dtype
    assert jnp.array_equal(out, ref), "Pallas reorg (stride=2) != reference"

    # Extra shapes / strides to exercise the tiling and generic stride path.
    x2 = jax.random.normal(jax.random.PRNGKey(1), (1, 5, 12, 24), dtype=jnp.float32)
    assert jnp.array_equal(reorg(x2, stride=2), reorg_reference(x2, stride=2))

    x3 = jax.random.normal(jax.random.PRNGKey(2), (1, 3, 8, 16), dtype=jnp.float32)
    assert jnp.array_equal(reorg(x3, stride=4), reorg_reference(x3, stride=4))

    print("KERNEL_OK")
</pallas_src>

<mosaic_0001>
module attributes {stable_mosaic.version = 11 : i64} {
  func.func @_reorg_kernel_strided(%arg0: memref<2x8x32xf32, #tpu.memory_space<vmem>>, %arg1: memref<4x2x8x8xf32, #tpu.memory_space<vmem>>) attributes {dimension_semantics = [], scalar_prefetch = 0 : i64, scratch_operands = 0 : i64, tpu.core_type = #tpu.core_type<tc>} {
    %c0 = arith.constant 0 : index
    %c0_0 = arith.constant 0 : index
    %c0_1 = arith.constant 0 : index
    %0 = tpu.strided_load %arg0[%c0, %c0_0, %c0_1] {strides = array<i32: 1, 1, 2>} : memref<2x8x32xf32, #tpu.memory_space<vmem>>, vector<2x8x8xf32>
    %c0_2 = arith.constant 0 : index
    %c0_3 = arith.constant 0 : index
    %c0_4 = arith.constant 0 : index
    %c0_5 = arith.constant 0 : index
    %1 = vector.load %arg1[%c0_2, %c0_3, %c0_4, %c0_5] : memref<4x2x8x8xf32, #tpu.memory_space<vmem>>, vector<1x2x8x8xf32>
    %2 = vector.shape_cast %1 : vector<1x2x8x8xf32> to vector<2x8x8xf32>
    %3 = vector.shape_cast %0 : vector<2x8x8xf32> to vector<1x2x8x8xf32>
    tpu.vector_store %arg1[%c0_2, %c0_3, %c0_4, %c0_5], %3 {strides = array<i32>} : memref<4x2x8x8xf32, #tpu.memory_space<vmem>>, vector<1x2x8x8xf32>,
    %c0_6 = arith.constant 0 : index
    %c0_7 = arith.constant 0 : index
    %c1 = arith.constant 1 : index
    %4 = tpu.strided_load %arg0[%c0_6, %c0_7, %c1] {strides = array<i32: 1, 1, 2>} : memref<2x8x32xf32, #tpu.memory_space<vmem>>, vector<2x8x8xf32>
    %c1_8 = arith.constant 1 : index
    %c0_9 = arith.constant 0 : index
    %c0_10 = arith.constant 0 : index
    %c0_11 = arith.constant 0 : index
    %5 = vector.load %arg1[%c1_8, %c0_9, %c0_10, %c0_11] : memref<4x2x8x8xf32, #tpu.memory_space<vmem>>, vector<1x2x8x8xf32>
    %6 = vector.shape_cast %5 : vector<1x2x8x8xf32> to vector<2x8x8xf32>
    %7 = vector.shape_cast %4 : vector<2x8x8xf32> to vector<1x2x8x8xf32>
    tpu.vector_store %arg1[%c1_8, %c0_9, %c0_10, %c0_11], %7 {strides = array<i32>} : memref<4x2x8x8xf32, #tpu.memory_space<vmem>>, vector<1x2x8x8xf32>,
    %c0_12 = arith.constant 0 : index
    %c0_13 = arith.constant 0 : index
    %c16 = arith.constant 16 : index
    %8 = tpu.strided_load %arg0[%c0_12, %c0_13, %c16] {strides = array<i32: 1, 1, 2>} : memref<2x8x32xf32, #tpu.memory_space<vmem>>, vector<2x8x8xf32>
    %c2 = arith.constant 2 : index
    %c0_14 = arith.constant 0 : index
    %c0_15 = arith.constant 0 : index
    %c0_16 = arith.constant 0 : index
    %9 = vector.load %arg1[%c2, %c0_14, %c0_15, %c0_16] : memref<4x2x8x8xf32, #tpu.memory_space<vmem>>, vector<1x2x8x8xf32>
    %10 = vector.shape_cast %9 : vector<1x2x8x8xf32> to vector<2x8x8xf32>
    %11 = vector.shape_cast %8 : vector<2x8x8xf32> to vector<1x2x8x8xf32>
    tpu.vector_store %arg1[%c2, %c0_14, %c0_15, %c0_16], %11 {strides = array<i32>} : memref<4x2x8x8xf32, #tpu.memory_space<vmem>>, vector<1x2x8x8xf32>,
    %c0_17 = arith.constant 0 : index
    %c0_18 = arith.constant 0 : index
    %c17 = arith.constant 17 : index
    %12 = tpu.strided_load %arg0[%c0_17, %c0_18, %c17] {strides = array<i32: 1, 1, 2>} : memref<2x8x32xf32, #tpu.memory_space<vmem>>, vector<2x8x8xf32>
    %c3 = arith.constant 3 : index
    %c0_19 = arith.constant 0 : index
    %c0_20 = arith.constant 0 : index
    %c0_21 = arith.constant 0 : index
    %13 = vector.load %arg1[%c3, %c0_19, %c0_20, %c0_21] : memref<4x2x8x8xf32, #tpu.memory_space<vmem>>, vector<1x2x8x8xf32>
    %14 = vector.shape_cast %13 : vector<1x2x8x8xf32> to vector<2x8x8xf32>
    %15 = vector.shape_cast %12 : vector<2x8x8xf32> to vector<1x2x8x8xf32>
    tpu.vector_store %arg1[%c3, %c0_19, %c0_20, %c0_21], %15 {strides = array<i32>} : memref<4x2x8x8xf32, #tpu.memory_space<vmem>>, vector<1x2x8x8xf32>,
    return
  }
}

module attributes {stable_mosaic.version = 11 : i64} {
  func.func @_reorg_kernel_reshape(%arg0: i32, %arg1: i32, %arg2: i32, %arg3: memref<1x4x8x32xf32, #tpu.memory_space<vmem>>, %arg4: memref<1x4x4x8x8xf32, #tpu.memory_space<vmem>>) attributes {dimension_semantics = [#tpu.dimension_semantics<parallel>, #tpu.dimension_semantics<parallel>, #tpu.dimension_semantics<parallel>], iteration_bounds = array<i64: 2, 1, 1>, scalar_prefetch = 0 : i64, scratch_operands = 0 : i64, tpu.core_type = #tpu.core_type<tc>, window_params = [{transform_indices = @transform_0, window_bounds = array<i64: 1, 4, 8, 32>}, {transform_indices = @transform_1, window_bounds = array<i64: 1, 4, 4, 8, 8>}]} {
    %c0 = arith.constant 0 : index
    %c0_0 = arith.constant 0 : index
    %c0_1 = arith.constant 0 : index
    %c0_2 = arith.constant 0 : index
    %0 = vector.load %arg3[%c0, %c0_0, %c0_1, %c0_2] : memref<1x4x8x32xf32, #tpu.memory_space<vmem>>, vector<1x4x8x16xf32>
    %1 = vector.shape_cast %0 : vector<1x4x8x16xf32> to vector<4x8x16xf32>
    %2 = vector.shape_cast %1 : vector<4x8x16xf32> to vector<4x8x8x2xf32>
    %3 = vector.extract_strided_slice %2 {offsets = [0, 0, 0, 0], sizes = [4, 8, 8, 1], strides = [1, 1, 1, 1]} : vector<4x8x8x2xf32> to vector<4x8x8x1xf32>
    %4 = vector.shape_cast %3 : vector<4x8x8x1xf32> to vector<4x8x8xf32>
    %c0_3 = arith.constant 0 : index
    %c0_4 = arith.constant 0 : index
    %c0_5 = arith.constant 0 : index
    %c0_6 = arith.constant 0 : index
    %c0_7 = arith.constant 0 : index
    %5 = vector.load %arg4[%c0_3, %c0_4, %c0_5, %c0_6, %c0_7] : memref<1x4x4x8x8xf32, #tpu.memory_space<vmem>>, vector<1x1x4x8x8xf32>
    %6 = vector.shape_cast %5 : vector<1x1x4x8x8xf32> to vector<4x8x8xf32>
    %7 = vector.shape_cast %4 : vector<4x8x8xf32> to vector<1x1x4x8x8xf32>
    tpu.vector_store %arg4[%c0_3, %c0_4, %c0_5, %c0_6, %c0_7], %7 {strides = array<i32>} : memref<1x4x4x8x8xf32, #tpu.memory_space<vmem>>, vector<1x1x4x8x8xf32>,
    %8 = vector.extract_strided_slice %2 {offsets = [0, 0, 0, 1], sizes = [4, 8, 8, 1], strides = [1, 1, 1, 1]} : vector<4x8x8x2xf32> to vector<4x8x8x1xf32>
    %9 = vector.shape_cast %8 : vector<4x8x8x1xf32> to vector<4x8x8xf32>
    %c0_8 = arith.constant 0 : index
    %c1 = arith.constant 1 : index
    %c0_9 = arith.constant 0 : index
    %c0_10 = arith.constant 0 : index
    %c0_11 = arith.constant 0 : index
    %10 = vector.load %arg4[%c0_8, %c1, %c0_9, %c0_10, %c0_11] : memref<1x4x4x8x8xf32, #tpu.memory_space<vmem>>, vector<1x1x4x8x8xf32>
    %11 = vector.shape_cast %10 : vector<1x1x4x8x8xf32> to vector<4x8x8xf32>
    %12 = vector.shape_cast %9 : vector<4x8x8xf32> to vector<1x1x4x8x8xf32>
    tpu.vector_store %arg4[%c0_8, %c1, %c0_9, %c0_10, %c0_11], %12 {strides = array<i32>} : memref<1x4x4x8x8xf32, #tpu.memory_space<vmem>>, vector<1x1x4x8x8xf32>,
    %c0_12 = arith.constant 0 : index
    %c0_13 = arith.constant 0 : index
    %c0_14 = arith.constant 0 : index
    %c16 = arith.constant 16 : index
    %13 = vector.load %arg3[%c0_12, %c0_13, %c0_14, %c16] : memref<1x4x8x32xf32, #tpu.memory_space<vmem>>, vector<1x4x8x16xf32>
    %14 = vector.shape_cast %13 : vector<1x4x8x16xf32> to vector<4x8x16xf32>
    %15 = vector.shape_cast %14 : vector<4x8x16xf32> to vector<4x8x8x2xf32>
    %16 = vector.extract_strided_slice %15 {offsets = [0, 0, 0, 0], sizes = [4, 8, 8, 1], strides = [1, 1, 1, 1]} : vector<4x8x8x2xf32> to vector<4x8x8x1xf32>
    %17 = vector.shape_cast %16 : vector<4x8x8x1xf32> to vector<4x8x8xf32>
    %c0_15 = arith.constant 0 : index
    %c2 = arith.constant 2 : index
    %c0_16 = arith.constant 0 : index
    %c0_17 = arith.constant 0 : index
    %c0_18 = arith.constant 0 : index
    %18 = vector.load %arg4[%c0_15, %c2, %c0_16, %c0_17, %c0_18] : memref<1x4x4x8x8xf32, #tpu.memory_space<vmem>>, vector<1x1x4x8x8xf32>
    %19 = vector.shape_cast %18 : vector<1x1x4x8x8xf32> to vector<4x8x8xf32>
    %20 = vector.shape_cast %17 : vector<4x8x8xf32> to vector<1x1x4x8x8xf32>
    tpu.vector_store %arg4[%c0_15, %c2, %c0_16, %c0_17, %c0_18], %20 {strides = array<i32>} : memref<1x4x4x8x8xf32, #tpu.memory_space<vmem>>, vector<1x1x4x8x8xf32>,
    %21 = vector.extract_strided_slice %15 {offsets = [0, 0, 0, 1], sizes = [4, 8, 8, 1], strides = [1, 1, 1, 1]} : vector<4x8x8x2xf32> to vector<4x8x8x1xf32>
    %22 = vector.shape_cast %21 : vector<4x8x8x1xf32> to vector<4x8x8xf32>
    %c0_19 = arith.constant 0 : index
    %c3 = arith.constant 3 : index
    %c0_20 = arith.constant 0 : index
    %c0_21 = arith.constant 0 : index
    %c0_22 = arith.constant 0 : index
    %23 = vector.load %arg4[%c0_19, %c3, %c0_20, %c0_21, %c0_22] : memref<1x4x4x8x8xf32, #tpu.memory_space<vmem>>, vector<1x1x4x8x8xf32>
    %24 = vector.shape_cast %23 : vector<1x1x4x8x8xf32> to vector<4x8x8xf32>
    %25 = vector.shape_cast %22 : vector<4x8x8xf32> to vector<1x1x4x8x8xf32>
    tpu.vector_store %arg4[%c0_19, %c3, %c0_20, %c0_21, %c0_22], %25 {strides = array<i32>} : memref<1x4x4x8x8xf32, #tpu.memory_space<vmem>>, vector<1x1x4x8x8xf32>,
    return
  }
  func.func @transform_0(%arg0: i32, %arg1: i32, %arg2: i32) -> (i32, i32, i32, i32) {
    %c0_i32 = arith.constant 0 : i32
    %c0_i32_0 = arith.constant 0 : i32
    return %arg0, %arg1, %arg2, %c0_i32 : i32, i32, i32, i32
  }
  func.func @transform_1(%arg0: i32, %arg1: i32, %arg2: i32) -> (i32, i32, i32, i32, i32) {
    %c0_i32 = arith.constant 0 : i32
    %c0_i32_0 = arith.constant 0 : i32
    %c0_i32_1 = arith.constant 0 : i32
    return %arg0, %c0_i32, %arg1, %arg2, %c0_i32_0 : i32, i32, i32, i32, i32
  }
}

</mosaic_0001>

<llo_original>
// kernel: _reorg_impl.1
$region0: #{_reorg_impl.1}
  #allocation0 [shape = 'u32[]', space=smem, size = 0x4, offset = 0x4, fixed_abs, tag = 'smem constant byte address 0x4 - core index']
  #allocation1 [shape = 'u32[144,128]{1,0:T(1,128)}', space=vmem, size = 0x12000, scoped, tag = 'internal scratch']
  %s0 = inlined_call_operand.vmem [shape: f32[2,4,8,32], index: 0, kind: input, shape index: {}]
  %s1 = inlined_call_operand.vmem [shape: f32[2,4,4,8,8], index: 1, kind: output, shape index: {}]
  %s2 = sld [smem:[#allocation0]]
  $region37: #{_reorg_impl.1} parent=0
    _
  %s4 = ssub.s32 1, %s2
  %s5 = scalar_select 0, %s4, %s2
  loop: start=0, step=1, limit=4
  $region2: #{_reorg_impl.1} parent=0 // loop_pre_header
    _
  $region3: #{_reorg_impl.1} parent=0 // loop_header
    %s7 = sphi 0, %s11
    %p8 = scmp.ge.s32.totalorder %s7, 4
    %s14 = sphi 0, %s33
    %s15 = sphi 0, %s29
    %s16 = sphi 0, %s25
    %s17 = sphi 0, %s14
    %s18 = sphi 0, %s15
    %s19 = sphi 0, %s16
    %s20 = sphi 0, %s17
    %s21 = sphi 0, %s18
    %s22 = sphi 0, %s19
    %s40 = sphi 0, %s42
    %s43 = sphi 0, %s40
    %s44 = sphi 0, %s43
    %s60 = sphi 0, %s44
    %s70 = sphi 0, %s72
    %s73 = sphi 0, %s70
    %s74 = sphi 0, %s73
    %s90 = sphi 0, %s74
  $region4: #{_reorg_impl.1} parent=0 // loop_header_branch
    %10 = sbr.rel (%p8) target = $region8
  $region5: #{_reorg_impl.1} parent=0 // loop_body
    %s12 = ssub.s32 %s7, 1
    %s13 = ssub.s32 %s7, 2
    %s23 = sadd.s32 1, %s16
    %p24 = scmp.ge.s32.totalorder %s23, 1
    %s25 = scalar_select %p24, 0, %s23
    %s26 = sadd.s32 1, %s15
    %s27 = scalar_select %p24, %s26, %s15
    %p28 = scmp.ge.s32.totalorder %s27, 1
    %s29 = scalar_select %p28, 0, %s27
    %s30 = sadd.s32 1, %s14
    %s31 = scalar_select %p28, %s30, %s14
    %p32 = scmp.ge.s32.totalorder %s31, 2
    %s33 = scalar_select %p32, 0, %s31
    %s34 = ssub.s32 %s14, %s33
    %s35 = ssub.s32 %s15, %s29
    %s36 = sor.u32 %s34, %s35
    %s37 = ssub.s32 %s16, %s25
    %s38 = sor.u32 %s36, %s37
    %p39 = scmp.eq.s32.totalorder %s38, 0
    %s41 = sadd.s32 %s40, 1
    %s42 = scalar_select %p39, %s40, %s41
    %p45 = pneg %p39
    %p46 = scmp.eq.s32.totalorder %s7, 1
    %p47 = por %p45, %p46
    %p48 = scmp.ne.s32.totalorder %s40, %s43
    %p49 = scmp.eq.s32.totalorder %s7, 0
    %p50 = por %p48, %p49
    %p51 = scmp.ne.s32.totalorder %s40, %s43
    %p52 = scmp.eq.s32.totalorder %s12, 1
    %p53 = por %p51, %p52
    %p54 = scmp.ne.s32.totalorder %s43, %s44
    %p55 = scmp.eq.s32.totalorder %s12, 0
    %p56 = por %p54, %p55
    %p57 = scmp.ne.s32.totalorder %s43, %s44
    %p58 = scmp.eq.s32.totalorder %s13, 1
    %p59 = por %p57, %p58
    %p61 = scmp.ne.s32.totalorder %s44, %s60
    %p62 = scmp.eq.s32.totalorder %s13, 0
    %p63 = por %p61, %p62
    %s64 = ssub.s32 %s14, %s33
    %s65 = ssub.s32 %s15, %s29
    %s66 = sor.u32 %s64, %s65
    %s67 = ssub.s32 %s16, %s25
    %s68 = sor.u32 %s66, %s67
    %p69 = scmp.eq.s32.totalorder %s68, 0
    %s71 = sadd.s32 %s70, 1
    %s72 = scalar_select %p69, %s70, %s71
    %p75 = pneg %p69
    %p76 = scmp.eq.s32.totalorder %s7, 1
    %p77 = por %p75, %p76
    %p78 = scmp.ne.s32.totalorder %s70, %s73
    %p79 = scmp.eq.s32.totalorder %s7, 0
    %p80 = por %p78, %p79
    %p81 = scmp.ne.s32.totalorder %s70, %s73
    %p82 = scmp.eq.s32.totalorder %s12, 1
    %p83 = por %p81, %p82
    %p84 = scmp.ne.s32.totalorder %s73, %s74
    %p85 = scmp.eq.s32.totalorder %s12, 0
    %p86 = por %p84, %p85
    %p87 = scmp.ne.s32.totalorder %s73, %s74
    %p88 = scmp.eq.s32.totalorder %s13, 1
    %p89 = por %p87, %p88
    %p91 = scmp.ne.s32.totalorder %s74, %s90
    %p92 = scmp.eq.s32.totalorder %s13, 0
    %p93 = por %p91, %p92
    %p94 = scmp.le.s32.totalorder 1, %s7
    %p95 = scmp.lt.s32.totalorder %s7, 3
    %p96 = pnand %p94, %p95
    %p97 = pneg %p96
    // Predicated region
    $region9: #{_reorg_impl.1} parent=5 // pred_check
      _
    $region10: #{_reorg_impl.1} parent=5 // pred_check_branch
      %99 = sbr.rel (%p96) target = $region12
    $region11: #{_reorg_impl.1} parent=5 // pred_region
      %s100 = ssub.s32 %s7, 1
    $region12: #{_reorg_impl.1} parent=5 // pred_fallthru
      _
    %p101 = scmp.lt.s32.totalorder %s7, 2
    // Predicated region
    $region13: #{_reorg_impl.1} parent=5 // pred_check
      %p102 = pneg %p101
    $region14: #{_reorg_impl.1} parent=5 // pred_check_branch
      %104 = sbr.rel (%p102) target = $region16
    $region15: #{_reorg_impl.1} parent=5 // pred_region
      // Predicated region
      $region17: #{_reorg_impl.1} parent=15 // pred_check
        %p105 = pneg %p50
      $region18: #{_reorg_impl.1} parent=15 // pred_check_branch
        %107 = sbr.rel (%p105) target = $region20
      $region19: #{_reorg_impl.1} parent=15 // pred_region
        %s108 = smul.u32 4, %s15
        %p109 = scmp.lt.s32.totalorder %s14, 1
        %s110 = scalar_select %p109, %s14, 1
        %p111 = scmp.lt.s32.totalorder %s108, 3
        %s112 = scalar_select %p111, %s108, 3
        %p113 = scmp.lt.s32.totalorder %s16, 0
        %s114 = scalar_select %p113, %s16, 0
        %s115 = sadd.s32 %s114, %s112
        %s116 = smul.addr %s110, 4
        %s117 = sadd.s32 %s115, %s116
        %s118 = smul.addr %s117, 8
        %s119 = scalar_lea.vmem %s0, %s118
        %s120 = smul.u32 4, %s15
      $region20: #{_reorg_impl.1} parent=15 // pred_fallthru
        _
    $region16: #{_reorg_impl.1} parent=5 // pred_fallthru
      _
    %p121 = scmp.le.s32.totalorder 1, %s7
    %p122 = scmp.lt.s32.totalorder %s7, 3
    %p123 = pnand %p121, %p122
    %p124 = pneg %p123
    // Predicated region
    $region21: #{_reorg_impl.1} parent=5 // pred_check
      _
    $region22: #{_reorg_impl.1} parent=5 // pred_check_branch
      %126 = sbr.rel (%p123) target = $region24
    $region23: #{_reorg_impl.1} parent=5 // pred_region
      %s127 = ssub.s32 %s7, 1
      %s128 = smul.u32 4, %s18
      %p129 = scmp.lt.s32.totalorder %s17, 1
      %s130 = scalar_select %p129, %s17, 1
      %p131 = scmp.lt.s32.totalorder %s128, 3
      %s132 = scalar_select %p131, %s128, 3
      %p133 = scmp.lt.s32.totalorder %s19, 0
      %s134 = scalar_select %p133, %s19, 0
      %s135 = sadd.s32 %s134, %s132
      %s136 = smul.addr %s130, 4
      %s137 = sadd.s32 %s135, %s136
      %s138 = smul.addr %s137, 8
      %s139 = scalar_lea.vmem %s0, %s138
      %p140 = pneg %p56
      %p141 = pneg %p53
      %p142 = pneg %p86
      %p143 = pneg %p83
      %s144 = smul.u32 4, %s18
      %p145 = scmp.lt.s32.totalorder %s17, 1
      %s146 = scalar_select %p145, %s17, 1
      %p147 = scmp.lt.s32.totalorder %s144, 3
      %s148 = scalar_select %p147, %s144, 3
      %p149 = scmp.lt.s32.totalorder %s19, 0
      %s150 = scalar_select %p149, %s19, 0
      %s151 = sadd.s32 %s150, %s148
      %s152 = smul.addr %s146, 16
      %s153 = sadd.s32 %s151, %s152
      %s154 = smul.addr %s153, 8
      %s155 = scalar_lea.vmem %s1, %s154
      %s156 = smul.u32 4, %s18
      %p157 = scmp.lt.s32.totalorder %s17, 1
      %s158 = scalar_select %p157, %s17, 1
      %p159 = scmp.lt.s32.totalorder %s156, 3
      %s160 = scalar_select %p159, %s156, 3
      %p161 = scmp.lt.s32.totalorder %s19, 0
      %s162 = scalar_select %p161, %s19, 0
      %s163 = sadd.s32 %s162, %s160
      %s164 = smul.addr %s158, 4
      %s165 = sadd.s32 %s163, %s164
      %s166 = smul.addr %s165, 8
      %s167 = scalar_lea.vmem %s0, %s166
      %s168 = smul.u32 4, %s18
      %s169 = smul.u32 4, %s18
      %p170 = scmp.lt.s32.totalorder %s17, 1
      %s171 = scalar_select %p170, %s17, 1
      %p172 = scmp.lt.s32.totalorder %s169, 3
      %s173 = scalar_select %p172, %s169, 3
      %p174 = scmp.lt.s32.totalorder %s19, 0
      %s175 = scalar_select %p174, %s19, 0
      %s176 = sadd.s32 %s175, %s173
      %s177 = smul.addr %s171, 16
      %s178 = sadd.s32 %s176, %s177
      %s179 = smul.addr %s178, 8
      %s180 = scalar_lea.vmem %s1, %s179
      %s181 = smul.u32 4, %s18
      %v182 = vld [vmem:[%s167] sm:$0xff]
      %v183 = vld [vmem:[%s167 + $0x8] sm:$0xff]
      %v184 = vld [vmem:[%s167 + $0x10] sm:$0xff]
      %v185 = vld [vmem:[%s167 + $0x18] sm:$0xff]
      %190 = vrot.lane.b32.xlu0 %v182, 126
      %v191 = vpop.permute.xlu0 %190
      %192 = vrot.lane.b32.xlu0 %v183, 126
      %v193 = vpop.permute.xlu0 %192
      %194 = vrot.lane.b32.xlu0 %v184, 126
      %v195 = vpop.permute.xlu0 %194
      %196 = vrot.lane.b32.xlu0 %v185, 126
      %v197 = vpop.permute.xlu0 %196
      %202 = vrot.lane.b32.xlu0 %v182, 124
      %v203 = vpop.permute.xlu0 %202
      %204 = vrot.lane.b32.xlu0 %v183, 124
      %v205 = vpop.permute.xlu0 %204
      %206 = vrot.lane.b32.xlu0 %v184, 124
      %v207 = vpop.permute.xlu0 %206
      %208 = vrot.lane.b32.xlu0 %v185, 124
      %v209 = vpop.permute.xlu0 %208
      %214 = vrot.lane.b32.xlu0 %v182, 122
      %v215 = vpop.permute.xlu0 %214
      %216 = vrot.lane.b32.xlu0 %v183, 122
      %v217 = vpop.permute.xlu0 %216
      %218 = vrot.lane.b32.xlu0 %v184, 122
      %v219 = vpop.permute.xlu0 %218
      %220 = vrot.lane.b32.xlu0 %v185, 122
      %v221 = vpop.permute.xlu0 %220
      %226 = vrot.lane.b32.xlu0 %v182, 120
      %v227 = vpop.permute.xlu0 %226
      %228 = vrot.lane.b32.xlu0 %v183, 120
      %v229 = vpop.permute.xlu0 %228
      %230 = vrot.lane.b32.xlu0 %v184, 120
      %v231 = vpop.permute.xlu0 %230
      %232 = vrot.lane.b32.xlu0 %v185, 120
      %v233 = vpop.permute.xlu0 %232
      %238 = vrot.lane.b32.xlu0 %v182, 118
      %v239 = vpop.permute.xlu0 %238
      %240 = vrot.lane.b32.xlu0 %v183, 118
      %v241 = vpop.permute.xlu0 %240
      %242 = vrot.lane.b32.xlu0 %v184, 118
      %v243 = vpop.permute.xlu0 %242
      %244 = vrot.lane.b32.xlu0 %v185, 118
      %v245 = vpop.permute.xlu0 %244
      %250 = vrot.lane.b32.xlu0 %v182, 116
      %v251 = vpop.permute.xlu0 %250
      %252 = vrot.lane.b32.xlu0 %v183, 116
      %v253 = vpop.permute.xlu0 %252
      %254 = vrot.lane.b32.xlu0 %v184, 116
      %v255 = vpop.permute.xlu0 %254
      %256 = vrot.lane.b32.xlu0 %v185, 116
      %v257 = vpop.permute.xlu0 %256
      %262 = vrot.lane.b32.xlu0 %v182, 114
      %v263 = vpop.permute.xlu0 %262
      %264 = vrot.lane.b32.xlu0 %v183, 114
      %v265 = vpop.permute.xlu0 %264
      %266 = vrot.lane.b32.xlu0 %v184, 114
      %v267 = vpop.permute.xlu0 %266
      %268 = vrot.lane.b32.xlu0 %v185, 114
      %v269 = vpop.permute.xlu0 %268
      %v274 = vcombine.low %v182, %v203
      %v275 = vcombine.high %v182, %v203
      %v277 = vunpack.c.l.s4 1983009808
      %v278 = vunpack.c.0.s8 %v277
      %v279 = vlaneseq
      %v280 = vshrl.u32 %v279, 7
      %v281 = vsub.s32 %v278, %v280
      %v282 = vrot.slane %v274, %v281
      %v284 = vunpack.c.l.s4 1983009808
      %v285 = vunpack.c.0.s8 %v284
      %v286 = vlaneseq
      %v287 = vshrl.u32 %v286, 7
      %v288 = vsub.s32 %v285, %v287
      %v289 = vrot.slane %v275, %v288
      %v290 = vcombine.low %v191, %v215
      %v291 = vcombine.high %v191, %v215
      %v293 = vunpack.c.l.s4 1983009808
      %v294 = vunpack.c.0.s8 %v293
      %v295 = vlaneseq
      %v296 = vshrl.u32 %v295, 7
      %v297 = vsub.s32 %v294, %v296
      %v298 = vrot.slane %v290, %v297
      %v300 = vunpack.c.l.s4 1983009808
      %v301 = vunpack.c.0.s8 %v300
      %v302 = vlaneseq
      %v303 = vshrl.u32 %v302, 7
      %v304 = vsub.s32 %v301, %v303
      %v305 = vrot.slane %v291, %v304
      %v306 = vcombine.low %v227, %v251
      %v307 = vcombine.high %v227, %v251
      %v309 = vunpack.c.l.s4 1983009808
      %v310 = vunpack.c.0.s8 %v309
      %v311 = vlaneseq
      %v312 = vshrl.u32 %v311, 7
      %v313 = vsub.s32 %v310, %v312
      %v314 = vrot.slane %v306, %v313
      %v316 = vunpack.c.l.s4 1983009808
      %v317 = vunpack.c.0.s8 %v316
      %v318 = vlaneseq
      %v319 = vshrl.u32 %v318, 7
      %v320 = vsub.s32 %v317, %v319
      %v321 = vrot.slane %v307, %v320
      %v322 = vcombine.low %v239, %v263
      %v323 = vcombine.high %v239, %v263
      %v325 = vunpack.c.l.s4 1983009808
      %v326 = vunpack.c.0.s8 %v325
      %v327 = vlaneseq
      %v328 = vshrl.u32 %v327, 7
      %v329 = vsub.s32 %v326, %v328
      %v330 = vrot.slane %v322, %v329
      %v332 = vunpack.c.l.s4 1983009808
      %v333 = vunpack.c.0.s8 %v332
      %v334 = vlaneseq
      %v335 = vshrl.u32 %v334, 7
      %v336 = vsub.s32 %v333, %v335
      %v337 = vrot.slane %v323, %v336
      %v338 = vcombine.low %v282, %v298
      %v339 = vcombine.high %v282, %v298
      %v341 = vunpack.c.l.s4 1934713408
      %v342 = vunpack.c.0.s8 %v341
      %v343 = vlaneseq
      %v344 = vshrl.u32 %v343, 7
      %v345 = vsub.s32 %v342, %v344
      %v346 = vrot.slane %v338, %v345
      %v348 = vunpack.c.l.s4 1934713408
      %v349 = vunpack.c.0.s8 %v348
      %v350 = vlaneseq
      %v351 = vshrl.u32 %v350, 7
      %v352 = vsub.s32 %v349, %v351
      %v353 = vrot.slane %v339, %v352
      %v354 = vcombine.low %v289, %v305
      %v355 = vcombine.high %v289, %v305
      %v357 = vunpack.c.l.s4 1934713408
      %v358 = vunpack.c.0.s8 %v357
      %v359 = vlaneseq
      %v360 = vshrl.u32 %v359, 7
      %v361 = vsub.s32 %v358, %v360
      %v362 = vrot.slane %v354, %v361
      %v364 = vunpack.c.l.s4 1934713408
      %v365 = vunpack.c.0.s8 %v364
      %v366 = vlaneseq
      %v367 = vshrl.u32 %v366, 7
      %v368 = vsub.s32 %v365, %v367
      %v369 = vrot.slane %v355, %v368
      %v370 = vcombine.low %v314, %v330
      %v371 = vcombine.high %v314, %v330
      %v373 = vunpack.c.l.s4 1934713408
      %v374 = vunpack.c.0.s8 %v373
      %v375 = vlaneseq
      %v376 = vshrl.u32 %v375, 7
      %v377 = vsub.s32 %v374, %v376
      %v378 = vrot.slane %v370, %v377
      %v380 = vunpack.c.l.s4 1934713408
      %v381 = vunpack.c.0.s8 %v380
      %v382 = vlaneseq
      %v383 = vshrl.u32 %v382, 7
      %v384 = vsub.s32 %v381, %v383
      %v385 = vrot.slane %v371, %v384
      %v386 = vcombine.low %v321, %v337
      %v387 = vcombine.high %v321, %v337
      %v389 = vunpack.c.l.s4 1934713408
      %v390 = vunpack.c.0.s8 %v389
      %v391 = vlaneseq
      %v392 = vshrl.u32 %v391, 7
      %v393 = vsub.s32 %v390, %v392
      %v394 = vrot.slane %v386, %v393
      %v396 = vunpack.c.l.s4 1934713408
      %v397 = vunpack.c.0.s8 %v396
      %v398 = vlaneseq
      %v399 = vshrl.u32 %v398, 7
      %v400 = vsub.s32 %v397, %v399
      %v401 = vrot.slane %v387, %v400
      %v402 = vcombine.low %v346, %v378
      %v403 = vcombine.high %v346, %v378
      %v404 = vcombine.low %v353, %v385
      %v405 = vcombine.high %v353, %v385
      %v406 = vcombine.low %v362, %v394
      %v407 = vcombine.high %v362, %v394
      %v408 = vcombine.low %v369, %v401
      %v409 = vcombine.high %v369, %v401
      %v410 = vcombine.low %v183, %v205
      %v411 = vcombine.high %v183, %v205
      %v413 = vunpack.c.l.s4 1983009808
      %v414 = vunpack.c.0.s8 %v413
      %v415 = vlaneseq
      %v416 = vshrl.u32 %v415, 7
      %v417 = vsub.s32 %v414, %v416
      %v418 = vrot.slane %v410, %v417
      %v420 = vunpack.c.l.s4 1983009808
      %v421 = vunpack.c.0.s8 %v420
      %v422 = vlaneseq
      %v423 = vshrl.u32 %v422, 7
      %v424 = vsub.s32 %v421, %v423
      %v425 = vrot.slane %v411, %v424
      %v426 = vcombine.low %v193, %v217
      %v427 = vcombine.high %v193, %v217
      %v429 = vunpack.c.l.s4 1983009808
      %v430 = vunpack.c.0.s8 %v429
      %v431 = vlaneseq
      %v432 = vshrl.u32 %v431, 7
      %v433 = vsub.s32 %v430, %v432
      %v434 = vrot.slane %v426, %v433
      %v436 = vunpack.c.l.s4 1983009808
      %v437 = vunpack.c.0.s8 %v436
      %v438 = vlaneseq
      %v439 = vshrl.u32 %v438, 7
      %v440 = vsub.s32 %v437, %v439
      %v441 = vrot.slane %v427, %v440
      %v442 = vcombine.low %v229, %v253
      %v443 = vcombine.high %v229, %v253
      %v445 = vunpack.c.l.s4 1983009808
      %v446 = vunpack.c.0.s8 %v445
      %v447 = vlaneseq
      %v448 = vshrl.u32 %v447, 7
      %v449 = vsub.s32 %v446, %v448
      %v450 = vrot.slane %v442, %v449
      %v452 = vunpack.c.l.s4 1983009808
      %v453 = vunpack.c.0.s8 %v452
      %v454 = vlaneseq
      %v455 = vshrl.u32 %v454, 7
      %v456 = vsub.s32 %v453, %v455
      %v457 = vrot.slane %v443, %v456
      %v458 = vcombine.low %v241, %v265
      %v459 = vcombine.high %v241, %v265
      %v461 = vunpack.c.l.s4 1983009808
      %v462 = vunpack.c.0.s8 %v461
      %v463 = vlaneseq
      %v464 = vshrl.u32 %v463, 7
      %v465 = vsub.s32 %v462, %v464
      %v466 = vrot.slane %v458, %v465
      %v468 = vunpack.c.l.s4 1983009808
      %v469 = vunpack.c.0.s8 %v468
      %v470 = vlaneseq
      %v471 = vshrl.u32 %v470, 7
      %v472 = vsub.s32 %v469, %v471
      %v473 = vrot.slane %v459, %v472
      %v474 = vcombine.low %v418, %v434
      %v475 = vcombine.high %v418, %v434
      %v477 = vunpack.c.l.s4 1934713408
      %v478 = vunpack.c.0.s8 %v477
      %v479 = vlaneseq
      %v480 = vshrl.u32 %v479, 7
      %v481 = vsub.s32 %v478, %v480
      %v482 = vrot.slane %v474, %v481
      %v484 = vunpack.c.l.s4 1934713408
      %v485 = vunpack.c.0.s8 %v484
      %v486 = vlaneseq
      %v487 = vshrl.u32 %v486, 7
      %v488 = vsub.s32 %v485, %v487
      %v489 = vrot.slane %v475, %v488
      %v490 = vcombine.low %v425, %v441
      %v491 = vcombine.high %v425, %v441
      %v493 = vunpack.c.l.s4 1934713408
      %v494 = vunpack.c.0.s8 %v493
      %v495 = vlaneseq
      %v496 = vshrl.u32 %v495, 7
      %v497 = vsub.s32 %v494, %v496
      %v498 = vrot.slane %v490, %v497
      %v500 = vunpack.c.l.s4 1934713408
      %v501 = vunpack.c.0.s8 %v500
      %v502 = vlaneseq
      %v503 = vshrl.u32 %v502, 7
      %v504 = vsub.s32 %v501, %v503
      %v505 = vrot.slane %v491, %v504
      %v506 = vcombine.low %v450, %v466
      %v507 = vcombine.high %v450, %v466
      %v509 = vunpack.c.l.s4 1934713408
      %v510 = vunpack.c.0.s8 %v509
      %v511 = vlaneseq
      %v512 = vshrl.u32 %v511, 7
      %v513 = vsub.s32 %v510, %v512
      %v514 = vrot.slane %v506, %v513
      %v516 = vunpack.c.l.s4 1934713408
      %v517 = vunpack.c.0.s8 %v516
      %v518 = vlaneseq
      %v519 = vshrl.u32 %v518, 7
      %v520 = vsub.s32 %v517, %v519
      %v521 = vrot.slane %v507, %v520
      %v522 = vcombine.low %v457, %v473
      %v523 = vcombine.high %v457, %v473
      %v525 = vunpack.c.l.s4 1934713408
      %v526 = vunpack.c.0.s8 %v525
      %v527 = vlaneseq
      %v528 = vshrl.u32 %v527, 7
      %v529 = vsub.s32 %v526, %v528
      %v530 = vrot.slane %v522, %v529
      %v532 = vunpack.c.l.s4 1934713408
      %v533 = vunpack.c.0.s8 %v532
      %v534 = vlaneseq
      %v535 = vshrl.u32 %v534, 7
      %v536 = vsub.s32 %v533, %v535
      %v537 = vrot.slane %v523, %v536
      %v538 = vcombine.low %v482, %v514
      %v539 = vcombine.high %v482, %v514
      %v540 = vcombine.low %v489, %v521
      %v541 = vcombine.high %v489, %v521
      %v542 = vcombine.low %v498, %v530
      %v543 = vcombine.high %v498, %v530
      %v544 = vcombine.low %v505, %v537
      %v545 = vcombine.high %v505, %v537
      %v546 = vcombine.low %v184, %v207
      %v547 = vcombine.high %v184, %v207
      %v549 = vunpack.c.l.s4 1983009808
      %v550 = vunpack.c.0.s8 %v549
      %v551 = vlaneseq
      %v552 = vshrl.u32 %v551, 7
      %v553 = vsub.s32 %v550, %v552
      %v554 = vrot.slane %v546, %v553
      %v556 = vunpack.c.l.s4 1983009808
      %v557 = vunpack.c.0.s8 %v556
      %v558 = vlaneseq
      %v559 = vshrl.u32 %v558, 7
      %v560 = vsub.s32 %v557, %v559
      %v561 = vrot.slane %v547, %v560
      %v562 = vcombine.low %v195, %v219
      %v563 = vcombine.high %v195, %v219
      %v565 = vunpack.c.l.s4 1983009808
      %v566 = vunpack.c.0.s8 %v565
      %v567 = vlaneseq
      %v568 = vshrl.u32 %v567, 7
      %v569 = vsub.s32 %v566, %v568
      %v570 = vrot.slane %v562, %v569
      %v572 = vunpack.c.l.s4 1983009808
      %v573 = vunpack.c.0.s8 %v572
      %v574 = vlaneseq
      %v575 = vshrl.u32 %v574, 7
      %v576 = vsub.s32 %v573, %v575
      %v577 = vrot.slane %v563, %v576
      %v578 = vcombine.low %v231, %v255
      %v579 = vcombine.high %v231, %v255
      %v581 = vunpack.c.l.s4 1983009808
      %v582 = vunpack.c.0.s8 %v581
      %v583 = vlaneseq
      %v584 = vshrl.u32 %v583, 7
      %v585 = vsub.s32 %v582, %v584
      %v586 = vrot.slane %v578, %v585
      %v588 = vunpack.c.l.s4 1983009808
      %v589 = vunpack.c.0.s8 %v588
      %v590 = vlaneseq
      %v591 = vshrl.u32 %v590, 7
      %v592 = vsub.s32 %v589, %v591
      %v593 = vrot.slane %v579, %v592
      %v594 = vcombine.low %v243, %v267
      %v595 = vcombine.high %v243, %v267
      %v597 = vunpack.c.l.s4 1983009808
      %v598 = vunpack.c.0.s8 %v597
      %v599 = vlaneseq
      %v600 = vshrl.u32 %v599, 7
      %v601 = vsub.s32 %v598, %v600
      %v602 = vrot.slane %v594, %v601
      %v604 = vunpack.c.l.s4 1983009808
      %v605 = vunpack.c.0.s8 %v604
      %v606 = vlaneseq
      %v607 = vshrl.u32 %v606, 7
      %v608 = vsub.s32 %v605, %v607
      %v609 = vrot.slane %v595, %v608
      %v610 = vcombine.low %v554, %v570
      %v611 = vcombine.high %v554, %v570
      %v613 = vunpack.c.l.s4 1934713408
      %v614 = vunpack.c.0.s8 %v613
      %v615 = vlaneseq
      %v616 = vshrl.u32 %v615, 7
      %v617 = vsub.s32 %v614, %v616
      %v618 = vrot.slane %v610, %v617
      %v620 = vunpack.c.l.s4 1934713408
      %v621 = vunpack.c.0.s8 %v620
      %v622 = vlaneseq
      %v623 = vshrl.u32 %v622, 7
      %v624 = vsub.s32 %v621, %v623
      %v625 = vrot.slane %v611, %v624
      %v626 = vcombine.low %v561, %v577
      %v627 = vcombine.high %v561, %v577
      %v629 = vunpack.c.l.s4 1934713408
      %v630 = vunpack.c.0.s8 %v629
      %v631 = vlaneseq
      %v632 = vshrl.u32 %v631, 7
      %v633 = vsub.s32 %v630, %v632
      %v634 = vrot.slane %v626, %v633
      %v636 = vunpack.c.l.s4 1934713408
      %v637 = vunpack.c.0.s8 %v636
      %v638 = vlaneseq
      %v639 = vshrl.u32 %v638, 7
      %v640 = vsub.s32 %v637, %v639
      %v641 = vrot.slane %v627, %v640
      %v642 = vcombine.low %v586, %v602
      %v643 = vcombine.high %v586, %v602
      %v645 = vunpack.c.l.s4 1934713408
      %v646 = vunpack.c.0.s8 %v645
      %v647 = vlaneseq
      %v648 = vshrl.u32 %v647, 7
      %v649 = vsub.s32 %v646, %v648
      %v650 = vrot.slane %v642, %v649
      %v652 = vunpack.c.l.s4 1934713408
      %v653 = vunpack.c.0.s8 %v652
      %v654 = vlaneseq
      %v655 = vshrl.u32 %v654, 7
      %v656 = vsub.s32 %v653, %v655
      %v657 = vrot.slane %v643, %v656
      %v658 = vcombine.low %v593, %v609
      %v659 = vcombine.high %v593, %v609
      %v661 = vunpack.c.l.s4 1934713408
      %v662 = vunpack.c.0.s8 %v661
      %v663 = vlaneseq
      %v664 = vshrl.u32 %v663, 7
      %v665 = vsub.s32 %v662, %v664
      %v666 = vrot.slane %v658, %v665
      %v668 = vunpack.c.l.s4 1934713408
      %v669 = vunpack.c.0.s8 %v668
      %v670 = vlaneseq
      %v671 = vshrl.u32 %v670, 7
      %v672 = vsub.s32 %v669, %v671
      %v673 = vrot.slane %v659, %v672
      %v674 = vcombine.low %v618, %v650
      %v675 = vcombine.high %v618, %v650
      %v676 = vcombine.low %v625, %v657
      %v677 = vcombine.high %v625, %v657
      %v678 = vcombine.low %v634, %v666
      %v679 = vcombine.high %v634, %v666
      %v680 = vcombine.low %v641, %v673
      %v681 = vcombine.high %v641, %v673
      %v682 = vcombine.low %v185, %v209
      %v683 = vcombine.high %v185, %v209
      %v685 = vunpack.c.l.s4 1983009808
      %v686 = vunpack.c.0.s8 %v685
      %v687 = vlaneseq
      %v688 = vshrl.u32 %v687, 7
      %v689 = vsub.s32 %v686, %v688
      %v690 = vrot.slane %v682, %v689
      %v692 = vunpack.c.l.s4 1983009808
      %v693 = vunpack.c.0.s8 %v692
      %v694 = vlaneseq
      %v695 = vshrl.u32 %v694, 7
      %v696 = vsub.s32 %v693, %v695
      %v697 = vrot.slane %v683, %v696
      %v698 = vcombine.low %v197, %v221
      %v699 = vcombine.high %v197, %v221
      %v701 = vunpack.c.l.s4 1983009808
      %v702 = vunpack.c.0.s8 %v701
      %v703 = vlaneseq
      %v704 = vshrl.u32 %v703, 7
      %v705 = vsub.s32 %v702, %v704
      %v706 = vrot.slane %v698, %v705
      %v708 = vunpack.c.l.s4 1983009808
      %v709 = vunpack.c.0.s8 %v708
      %v710 = vlaneseq
      %v711 = vshrl.u32 %v710, 7
      %v712 = vsub.s32 %v709, %v711
      %v713 = vrot.slane %v699, %v712
      %v714 = vcombine.low %v233, %v257
      %v715 = vcombine.high %v233, %v257
      %v717 = vunpack.c.l.s4 1983009808
      %v718 = vunpack.c.0.s8 %v717
      %v719 = vlaneseq
      %v720 = vshrl.u32 %v719, 7
      %v721 = vsub.s32 %v718, %v720
      %v722 = vrot.slane %v714, %v721
      %v724 = vunpack.c.l.s4 1983009808
      %v725 = vunpack.c.0.s8 %v724
      %v726 = vlaneseq
      %v727 = vshrl.u32 %v726, 7
      %v728 = vsub.s32 %v725, %v727
      %v729 = vrot.slane %v715, %v728
      %v730 = vcombine.low %v245, %v269
      %v731 = vcombine.high %v245, %v269
      %v733 = vunpack.c.l.s4 1983009808
      %v734 = vunpack.c.0.s8 %v733
      %v735 = vlaneseq
      %v736 = vshrl.u32 %v735, 7
      %v737 = vsub.s32 %v734, %v736
      %v738 = vrot.slane %v730, %v737
      %v740 = vunpack.c.l.s4 1983009808
      %v741 = vunpack.c.0.s8 %v740
      %v742 = vlaneseq
      %v743 = vshrl.u32 %v742, 7
      %v744 = vsub.s32 %v741, %v743
      %v745 = vrot.slane %v731, %v744
      %v746 = vcombine.low %v690, %v706
      %v747 = vcombine.high %v690, %v706
      %v749 = vunpack.c.l.s4 1934713408
      %v750 = vunpack.c.0.s8 %v749
      %v751 = vlaneseq
      %v752 = vshrl.u32 %v751, 7
      %v753 = vsub.s32 %v750, %v752
      %v754 = vrot.slane %v746, %v753
      %v756 = vunpack.c.l.s4 1934713408
      %v757 = vunpack.c.0.s8 %v756
      %v758 = vlaneseq
      %v759 = vshrl.u32 %v758, 7
      %v760 = vsub.s32 %v757, %v759
      %v761 = vrot.slane %v747, %v760
      %v762 = vcombine.low %v697, %v713
      %v763 = vcombine.high %v697, %v713
      %v765 = vunpack.c.l.s4 1934713408
      %v766 = vunpack.c.0.s8 %v765
      %v767 = vlaneseq
      %v768 = vshrl.u32 %v767, 7
      %v769 = vsub.s32 %v766, %v768
      %v770 = vrot.slane %v762, %v769
      %v772 = vunpack.c.l.s4 1934713408
      %v773 = vunpack.c.0.s8 %v772
      %v774 = vlaneseq
      %v775 = vshrl.u32 %v774, 7
      %v776 = vsub.s32 %v773, %v775
      %v777 = vrot.slane %v763, %v776
      %v778 = vcombine.low %v722, %v738
      %v779 = vcombine.high %v722, %v738
      %v781 = vunpack.c.l.s4 1934713408
      %v782 = vunpack.c.0.s8 %v781
      %v783 = vlaneseq
      %v784 = vshrl.u32 %v783, 7
      %v785 = vsub.s32 %v782, %v784
      %v786 = vrot.slane %v778, %v785
      %v788 = vunpack.c.l.s4 1934713408
      %v789 = vunpack.c.0.s8 %v788
      %v790 = vlaneseq
      %v791 = vshrl.u32 %v790, 7
      %v792 = vsub.s32 %v789, %v791
      %v793 = vrot.slane %v779, %v792
      %v794 = vcombine.low %v729, %v745
      %v795 = vcombine.high %v729, %v745
      %v797 = vunpack.c.l.s4 1934713408
      %v798 = vunpack.c.0.s8 %v797
      %v799 = vlaneseq
      %v800 = vshrl.u32 %v799, 7
      %v801 = vsub.s32 %v798, %v800
      %v802 = vrot.slane %v794, %v801
      %v804 = vunpack.c.l.s4 1934713408
      %v805 = vunpack.c.0.s8 %v804
      %v806 = vlaneseq
      %v807 = vshrl.u32 %v806, 7
      %v808 = vsub.s32 %v805, %v807
      %v809 = vrot.slane %v795, %v808
      %v810 = vcombine.low %v754, %v786
      %v811 = vcombine.high %v754, %v786
      %v812 = vcombine.low %v761, %v793
      %v813 = vcombine.high %v761, %v793
      %v814 = vcombine.low %v770, %v802
      %v815 = vcombine.high %v770, %v802
      %v816 = vcombine.low %v777, %v809
      %v817 = vcombine.high %v777, %v809
      %850 = vset.pattern.permute.xlu0 0
      %851 = vperm.xlu0 %850, %v402
      %v852 = vpop.permute.xlu0 %851
      %853 = vset.pattern.permute.xlu0 0
      %854 = vperm.xlu0 %853, %v403
      %v855 = vpop.permute.xlu0 %854
      %856 = vset.pattern.permute.xlu0 0
      %857 = vperm.xlu0 %856, %v404
      %v858 = vpop.permute.xlu0 %857
      %859 = vset.pattern.permute.xlu0 0
      %860 = vperm.xlu0 %859, %v405
      %v861 = vpop.permute.xlu0 %860
      %862 = vset.pattern.permute.xlu0 0
      %863 = vperm.xlu0 %862, %v406
      %v864 = vpop.permute.xlu0 %863
      %865 = vset.pattern.permute.xlu0 0
      %866 = vperm.xlu0 %865, %v407
      %v867 = vpop.permute.xlu0 %866
      %868 = vset.pattern.permute.xlu0 0
      %869 = vperm.xlu0 %868, %v408
      %v870 = vpop.permute.xlu0 %869
      %871 = vset.pattern.permute.xlu0 0
      %872 = vperm.xlu0 %871, %v409
      %v873 = vpop.permute.xlu0 %872
      %874 = vset.pattern.permute.xlu0 0
      %875 = vperm.xlu0 %874, %v538
      %v876 = vpop.permute.xlu0 %875
      %877 = vset.pattern.permute.xlu0 0
      %878 = vperm.xlu0 %877, %v539
      %v879 = vpop.permute.xlu0 %878
      %880 = vset.pattern.permute.xlu0 0
      %881 = vperm.xlu0 %880, %v540
      %v882 = vpop.permute.xlu0 %881
      %883 = vset.pattern.permute.xlu0 0
      %884 = vperm.xlu0 %883, %v541
      %v885 = vpop.permute.xlu0 %884
      %886 = vset.pattern.permute.xlu0 0
      %887 = vperm.xlu0 %886, %v542
      %v888 = vpop.permute.xlu0 %887
      %889 = vset.pattern.permute.xlu0 0
      %890 = vperm.xlu0 %889, %v543
      %v891 = vpop.permute.xlu0 %890
      %892 = vset.pattern.permute.xlu0 0
      %893 = vperm.xlu0 %892, %v544
      %v894 = vpop.permute.xlu0 %893
      %895 = vset.pattern.permute.xlu0 0
      %896 = vperm.xlu0 %895, %v545
      %v897 = vpop.permute.xlu0 %896
      %898 = vset.pattern.permute.xlu0 0
      %899 = vperm.xlu0 %898, %v674
      %v900 = vpop.permute.xlu0 %899
      %901 = vset.pattern.permute.xlu0 0
      %902 = vperm.xlu0 %901, %v675
      %v903 = vpop.permute.xlu0 %902
      %904 = vset.pattern.permute.xlu0 0
      %905 = vperm.xlu0 %904, %v676
      %v906 = vpop.permute.xlu0 %905
      %907 = vset.pattern.permute.xlu0 0
      %908 = vperm.xlu0 %907, %v677
      %v909 = vpop.permute.xlu0 %908
      %910 = vset.pattern.permute.xlu0 0
      %911 = vperm.xlu0 %910, %v678
      %v912 = vpop.permute.xlu0 %911
      %913 = vset.pattern.permute.xlu0 0
      %914 = vperm.xlu0 %913, %v679
      %v915 = vpop.permute.xlu0 %914
      %916 = vset.pattern.permute.xlu0 0
      %917 = vperm.xlu0 %916, %v680
      %v918 = vpop.permute.xlu0 %917
      %919 = vset.pattern.permute.xlu0 0
      %920 = vperm.xlu0 %919, %v681
      %v921 = vpop.permute.xlu0 %920
      %922 = vset.pattern.permute.xlu0 0
      %923 = vperm.xlu0 %922, %v810
      %v924 = vpop.permute.xlu0 %923
      %925 = vset.pattern.permute.xlu0 0
      %926 = vperm.xlu0 %925, %v811
      %v927 = vpop.permute.xlu0 %926
      %928 = vset.pattern.permute.xlu0 0
      %929 = vperm.xlu0 %928, %v812
      %v930 = vpop.permute.xlu0 %929
      %931 = vset.pattern.permute.xlu0 0
      %932 = vperm.xlu0 %931, %v813
      %v933 = vpop.permute.xlu0 %932
      %934 = vset.pattern.permute.xlu0 0
      %935 = vperm.xlu0 %934, %v814
      %v936 = vpop.permute.xlu0 %935
      %937 = vset.pattern.permute.xlu0 0
      %938 = vperm.xlu0 %937, %v815
      %v939 = vpop.permute.xlu0 %938
      %940 = vset.pattern.permute.xlu0 0
      %941 = vperm.xlu0 %940, %v816
      %v942 = vpop.permute.xlu0 %941
      %943 = vset.pattern.permute.xlu0 0
      %944 = vperm.xlu0 %943, %v817
      %v945 = vpop.permute.xlu0 %944
      %v946 = vlaneseq
      %v947 = vand.u32 %v946, 127
      %v948 = vlaneseq
      %v949 = vshrl.u32 %v948, 7
      %v950 = vsub.s32 %v947, %v949
      %v951 = vrot.slane %v852, %v950
      %v952 = vlaneseq
      %v953 = vshrl.u32 %v952, 7
      %v954 = vsub.s32 %v947, %v953
      %v955 = vrot.slane %v855, %v954
      %v956 = vlaneseq
      %v957 = vshrl.u32 %v956, 7
      %v958 = vsub.s32 %v947, %v957
      %v959 = vrot.slane %v858, %v958
      %v960 = vlaneseq
      %v961 = vshrl.u32 %v960, 7
      %v962 = vsub.s32 %v947, %v961
      %v963 = vrot.slane %v861, %v962
      %v964 = vlaneseq
      %v965 = vshrl.u32 %v964, 7
      %v966 = vsub.s32 %v947, %v965
      %v967 = vrot.slane %v864, %v966
      %v968 = vlaneseq
      %v969 = vshrl.u32 %v968, 7
      %v970 = vsub.s32 %v947, %v969
      %v971 = vrot.slane %v867, %v970
      %v972 = vlaneseq
      %v973 = vshrl.u32 %v972, 7
      %v974 = vsub.s32 %v947, %v973
      %v975 = vrot.slane %v870, %v974
      %v976 = vlaneseq
      %v977 = vshrl.u32 %v976, 7
      %v978 = vsub.s32 %v947, %v977
      %v979 = vrot.slane %v873, %v978
      %v980 = vlaneseq
      %v981 = vshrl.u32 %v980, 7
      %v982 = vsub.s32 %v947, %v981
      %v983 = vrot.slane %v876, %v982
      %v984 = vlaneseq
      %v985 = vshrl.u32 %v984, 7
      %v986 = vsub.s32 %v947, %v985
      %v987 = vrot.slane %v879, %v986
      %v988 = vlaneseq
      %v989 = vshrl.u32 %v988, 7
      %v990 = vsub.s32 %v947, %v989
      %v991 = vrot.slane %v882, %v990
      %v992 = vlaneseq
      %v993 = vshrl.u32 %v992, 7
      %v994 = vsub.s32 %v947, %v993
      %v995 = vrot.slane %v885, %v994
      %v996 = vlaneseq
      %v997 = vshrl.u32 %v996, 7
      %v998 = vsub.s32 %v947, %v997
      %v999 = vrot.slane %v888, %v998
      %v1000 = vlaneseq
      %v1001 = vshrl.u32 %v1000, 7
      %v1002 = vsub.s32 %v947, %v1001
      %v1003 = vrot.slane %v891, %v1002
      %v1004 = vlaneseq
      %v1005 = vshrl.u32 %v1004, 7
      %v1006 = vsub.s32 %v947, %v1005
      %v1007 = vrot.slane %v894, %v1006
      %v1008 = vlaneseq
      %v1009 = vshrl.u32 %v1008, 7
      %v1010 = vsub.s32 %v947, %v1009
      %v1011 = vrot.slane %v897, %v1010
      %v1012 = vlaneseq
      %v1013 = vshrl.u32 %v1012, 7
      %v1014 = vsub.s32 %v947, %v1013
      %v1015 = vrot.slane %v900, %v1014
      %v1016 = vlaneseq
      %v1017 = vshrl.u32 %v1016, 7
      %v1018 = vsub.s32 %v947, %v1017
      %v1019 = vrot.slane %v903, %v1018
      %v1020 = vlaneseq
      %v1021 = vshrl.u32 %v1020, 7
      %v1022 = vsub.s32 %v947, %v1021
      %v1023 = vrot.slane %v906, %v1022
      %v1024 = vlaneseq
      %v1025 = vshrl.u32 %v1024, 7
      %v1026 = vsub.s32 %v947, %v1025
      %v1027 = vrot.slane %v909, %v1026
      %v1028 = vlaneseq
      %v1029 = vshrl.u32 %v1028, 7
      %v1030 = vsub.s32 %v947, %v1029
      %v1031 = vrot.slane %v912, %v1030
      %v1032 = vlaneseq
      %v1033 = vshrl.u32 %v1032, 7
      %v1034 = vsub.s32 %v947, %v1033
      %v1035 = vrot.slane %v915, %v1034
      %v1036 = vlaneseq
      %v1037 = vshrl.u32 %v1036, 7
      %v1038 = vsub.s32 %v947, %v1037
      %v1039 = vrot.slane %v918, %v1038
      %v1040 = vlaneseq
      %v1041 = vshrl.u32 %v1040, 7
      %v1042 = vsub.s32 %v947, %v1041
      %v1043 = vrot.slane %v921, %v1042
      %v1044 = vlaneseq
      %v1045 = vshrl.u32 %v1044, 7
      %v1046 = vsub.s32 %v947, %v1045
      %v1047 = vrot.slane %v924, %v1046
      %v1048 = vlaneseq
      %v1049 = vshrl.u32 %v1048, 7
      %v1050 = vsub.s32 %v947, %v1049
      %v1051 = vrot.slane %v927, %v1050
      %v1052 = vlaneseq
      %v1053 = vshrl.u32 %v1052, 7
      %v1054 = vsub.s32 %v947, %v1053
      %v1055 = vrot.slane %v930, %v1054
      %v1056 = vlaneseq
      %v1057 = vshrl.u32 %v1056, 7
      %v1058 = vsub.s32 %v947, %v1057
      %v1059 = vrot.slane %v933, %v1058
      %v1060 = vlaneseq
      %v1061 = vshrl.u32 %v1060, 7
      %v1062 = vsub.s32 %v947, %v1061
      %v1063 = vrot.slane %v936, %v1062
      %v1064 = vlaneseq
      %v1065 = vshrl.u32 %v1064, 7
      %v1066 = vsub.s32 %v947, %v1065
      %v1067 = vrot.slane %v939, %v1066
      %v1068 = vlaneseq
      %v1069 = vshrl.u32 %v1068, 7
      %v1070 = vsub.s32 %v947, %v1069
      %v1071 = vrot.slane %v942, %v1070
      %v1072 = vlaneseq
      %v1073 = vshrl.u32 %v1072, 7
      %v1074 = vsub.s32 %v947, %v1073
      %v1075 = vrot.slane %v945, %v1074
      %vm1076 = vcmask 1041409
      %v1077 = vsel %vm1076, %v955, %v951
      %vm1078 = vcmask 1042434
      %v1079 = vsel %vm1078, %v959, %v1077
      %vm1080 = vcmask 1043459
      %v1081 = vsel %vm1080, %v963, %v1079
      %vm1082 = vcmask 1044484
      %v1083 = vsel %vm1082, %v967, %v1081
      %vm1084 = vcmask 1045509
      %v1085 = vsel %vm1084, %v971, %v1083
      %vm1086 = vcmask 1046534
      %v1087 = vsel %vm1086, %v975, %v1085
      %vm1088 = vcmask 1047559
      %v1089 = vsel %vm1088, %v979, %v1087
      %v1090 = vsel %vm1076, %v987, %v983
      %v1091 = vsel %vm1078, %v991, %v1090
      %v1092 = vsel %vm1080, %v995, %v1091
      %v1093 = vsel %vm1082, %v999, %v1092
      %v1094 = vsel %vm1084, %v1003, %v1093
      %v1095 = vsel %vm1086, %v1007, %v1094
      %v1096 = vsel %vm1088, %v1011, %v1095
      %v1097 = vsel %vm1076, %v1019, %v1015
      %v1098 = vsel %vm1078, %v1023, %v1097
      %v1099 = vsel %vm1080, %v1027, %v1098
      %v1100 = vsel %vm1082, %v1031, %v1099
      %v1101 = vsel %vm1084, %v1035, %v1100
      %v1102 = vsel %vm1086, %v1039, %v1101
      %v1103 = vsel %vm1088, %v1043, %v1102
      %v1104 = vsel %vm1076, %v1051, %v1047
      %v1105 = vsel %vm1078, %v1055, %v1104
      %v1106 = vsel %vm1080, %v1059, %v1105
      %v1107 = vsel %vm1082, %v1063, %v1106
      %v1108 = vsel %vm1084, %v1067, %v1107
      %v1109 = vsel %vm1086, %v1071, %v1108
      %v1110 = vsel %vm1088, %v1075, %v1109
      %vm1115 = vcmask 64512
      %1116 = vst.msk [vmem:[%s180] sm:$0xff] %vm1115, %v1089
      %1117 = vst.msk [vmem:[%s180 + $0x8] sm:$0xff] %vm1115, %v1096
      %1118 = vst.msk [vmem:[%s180 + $0x10] sm:$0xff] %vm1115, %v1103
      %1119 = vst.msk [vmem:[%s180 + $0x18] sm:$0xff] %vm1115, %v1110
      %1120 = vset.pattern.permute.xlu0 1
      %1121 = vperm.xlu0 %1120, %v402
      %v1122 = vpop.permute.xlu0 %1121
      %1123 = vset.pattern.permute.xlu0 1
      %1124 = vperm.xlu0 %1123, %v403
      %v1125 = vpop.permute.xlu0 %1124
      %1126 = vset.pattern.permute.xlu0 1
      %1127 = vperm.xlu0 %1126, %v404
      %v1128 = vpop.permute.xlu0 %1127
      %1129 = vset.pattern.permute.xlu0 1
      %1130 = vperm.xlu0 %1129, %v405
      %v1131 = vpop.permute.xlu0 %1130
      %1132 = vset.pattern.permute.xlu0 1
      %1133 = vperm.xlu0 %1132, %v406
      %v1134 = vpop.permute.xlu0 %1133
      %1135 = vset.pattern.permute.xlu0 1
      %1136 = vperm.xlu0 %1135, %v407
      %v1137 = vpop.permute.xlu0 %1136
      %1138 = vset.pattern.permute.xlu0 1
      %1139 = vperm.xlu0 %1138, %v408
      %v1140 = vpop.permute.xlu0 %1139
      %1141 = vset.pattern.permute.xlu0 1
      %1142 = vperm.xlu0 %1141, %v409
      %v1143 = vpop.permute.xlu0 %1142
      %1144 = vset.pattern.permute.xlu0 1
      %1145 = vperm.xlu0 %1144, %v538
      %v1146 = vpop.permute.xlu0 %1145
      %1147 = vset.pattern.permute.xlu0 1
      %1148 = vperm.xlu0 %1147, %v539
      %v1149 = vpop.permute.xlu0 %1148
      %1150 = vset.pattern.permute.xlu0 1
      %1151 = vperm.xlu0 %1150, %v540
      %v1152 = vpop.permute.xlu0 %1151
      %1153 = vset.pattern.permute.xlu0 1
      %1154 = vperm.xlu0 %1153, %v541
      %v1155 = vpop.permute.xlu0 %1154
      %1156 = vset.pattern.permute.xlu0 1
      %1157 = vperm.xlu0 %1156, %v542
      %v1158 = vpop.permute.xlu0 %1157
      %1159 = vset.pattern.permute.xlu0 1
      %1160 = vperm.xlu0 %1159, %v543
      %v1161 = vpop.permute.xlu0 %1160
      %1162 = vset.pattern.permute.xlu0 1
      %1163 = vperm.xlu0 %1162, %v544
      %v1164 = vpop.permute.xlu0 %1163
      %1165 = vset.pattern.permute.xlu0 1
      %1166 = vperm.xlu0 %1165, %v545
      %v1167 = vpop.permute.xlu0 %1166
      %1168 = vset.pattern.permute.xlu0 1
      %1169 = vperm.xlu0 %1168, %v674
      %v1170 = vpop.permute.xlu0 %1169
      %1171 = vset.pattern.permute.xlu0 1
      %1172 = vperm.xlu0 %1171, %v675
      %v1173 = vpop.permute.xlu0 %1172
      %1174 = vset.pattern.permute.xlu0 1
      %1175 = vperm.xlu0 %1174, %v676
      %v1176 = vpop.permute.xlu0 %1175
      %1177 = vset.pattern.permute.xlu0 1
      %1178 = vperm.xlu0 %1177, %v677
      %v1179 = vpop.permute.xlu0 %1178
      %1180 = vset.pattern.permute.xlu0 1
      %1181 = vperm.xlu0 %1180, %v678
      %v1182 = vpop.permute.xlu0 %1181
      %1183 = vset.pattern.permute.xlu0 1
      %1184 = vperm.xlu0 %1183, %v679
      %v1185 = vpop.permute.xlu0 %1184
      %1186 = vset.pattern.permute.xlu0 1
      %1187 = vperm.xlu0 %1186, %v680
      %v1188 = vpop.permute.xlu0 %1187
      %1189 = vset.pattern.permute.xlu0 1
      %1190 = vperm.xlu0 %1189, %v681
      %v1191 = vpop.permute.xlu0 %1190
      %1192 = vset.pattern.permute.xlu0 1
      %1193 = vperm.xlu0 %1192, %v810
      %v1194 = vpop.permute.xlu0 %1193
      %1195 = vset.pattern.permute.xlu0 1
      %1196 = vperm.xlu0 %1195, %v811
      %v1197 = vpop.permute.xlu0 %1196
      %1198 = vset.pattern.permute.xlu0 1
      %1199 = vperm.xlu0 %1198, %v812
      %v1200 = vpop.permute.xlu0 %1199
      %1201 = vset.pattern.permute.xlu0 1
      %1202 = vperm.xlu0 %1201, %v813
      %v1203 = vpop.permute.xlu0 %1202
      %1204 = vset.pattern.permute.xlu0 1
      %1205 = vperm.xlu0 %1204, %v814
      %v1206 = vpop.permute.xlu0 %1205
      %1207 = vset.pattern.permute.xlu0 1
      %1208 = vperm.xlu0 %1207, %v815
      %v1209 = vpop.permute.xlu0 %1208
      %1210 = vset.pattern.permute.xlu0 1
      %1211 = vperm.xlu0 %1210, %v816
      %v1212 = vpop.permute.xlu0 %1211
      %1213 = vset.pattern.permute.xlu0 1
      %1214 = vperm.xlu0 %1213, %v817
      %v1215 = vpop.permute.xlu0 %1214
      %v1216 = vlaneseq
      %v1217 = vshrl.u32 %v1216, 7
      %v1218 = vsub.s32 %v947, %v1217
      %v1219 = vrot.slane %v1122, %v1218
      %v1220 = vlaneseq
      %v1221 = vshrl.u32 %v1220, 7
      %v1222 = vsub.s32 %v947, %v1221
      %v1223 = vrot.slane %v1125, %v1222
      %v1224 = vlaneseq
      %v1225 = vshrl.u32 %v1224, 7
      %v1226 = vsub.s32 %v947, %v1225
      %v1227 = vrot.slane %v1128, %v1226
      %v1228 = vlaneseq
      %v1229 = vshrl.u32 %v1228, 7
      %v1230 = vsub.s32 %v947, %v1229
      %v1231 = vrot.slane %v1131, %v1230
      %v1232 = vlaneseq
      %v1233 = vshrl.u32 %v1232, 7
      %v1234 = vsub.s32 %v947, %v1233
      %v1235 = vrot.slane %v1134, %v1234
      %v1236 = vlaneseq
      %v1237 = vshrl.u32 %v1236, 7
      %v1238 = vsub.s32 %v947, %v1237
      %v1239 = vrot.slane %v1137, %v1238
      %v1240 = vlaneseq
      %v1241 = vshrl.u32 %v1240, 7
      %v1242 = vsub.s32 %v947, %v1241
      %v1243 = vrot.slane %v1140, %v1242
      %v1244 = vlaneseq
      %v1245 = vshrl.u32 %v1244, 7
      %v1246 = vsub.s32 %v947, %v1245
      %v1247 = vrot.slane %v1143, %v1246
      %v1248 = vlaneseq
      %v1249 = vshrl.u32 %v1248, 7
      %v1250 = vsub.s32 %v947, %v1249
      %v1251 = vrot.slane %v1146, %v1250
      %v1252 = vlaneseq
      %v1253 = vshrl.u32 %v1252, 7
      %v1254 = vsub.s32 %v947, %v1253
      %v1255 = vrot.slane %v1149, %v1254
      %v1256 = vlaneseq
      %v1257 = vshrl.u32 %v1256, 7
      %v1258 = vsub.s32 %v947, %v1257
      %v1259 = vrot.slane %v1152, %v1258
      %v1260 = vlaneseq
      %v1261 = vshrl.u32 %v1260, 7
      %v1262 = vsub.s32 %v947, %v1261
      %v1263 = vrot.slane %v1155, %v1262
      %v1264 = vlaneseq
      %v1265 = vshrl.u32 %v1264, 7
      %v1266 = vsub.s32 %v947, %v1265
      %v1267 = vrot.slane %v1158, %v1266
      %v1268 = vlaneseq
      %v1269 = vshrl.u32 %v1268, 7
      %v1270 = vsub.s32 %v947, %v1269
      %v1271 = vrot.slane %v1161, %v1270
      %v1272 = vlaneseq
      %v1273 = vshrl.u32 %v1272, 7
      %v1274 = vsub.s32 %v947, %v1273
      %v1275 = vrot.slane %v1164, %v1274
      %v1276 = vlaneseq
      %v1277 = vshrl.u32 %v1276, 7
      %v1278 = vsub.s32 %v947, %v1277
      %v1279 = vrot.slane %v1167, %v1278
      %v1280 = vlaneseq
      %v1281 = vshrl.u32 %v1280, 7
      %v1282 = vsub.s32 %v947, %v1281
      %v1283 = vrot.slane %v1170, %v1282
      %v1284 = vlaneseq
      %v1285 = vshrl.u32 %v1284, 7
      %v1286 = vsub.s32 %v947, %v1285
      %v1287 = vrot.slane %v1173, %v1286
      %v1288 = vlaneseq
      %v1289 = vshrl.u32 %v1288, 7
      %v1290 = vsub.s32 %v947, %v1289
      %v1291 = vrot.slane %v1176, %v1290
      %v1292 = vlaneseq
      %v1293 = vshrl.u32 %v1292, 7
      %v1294 = vsub.s32 %v947, %v1293
      %v1295 = vrot.slane %v1179, %v1294
      %v1296 = vlaneseq
      %v1297 = vshrl.u32 %v1296, 7
      %v1298 = vsub.s32 %v947, %v1297
      %v1299 = vrot.slane %v1182, %v1298
      %v1300 = vlaneseq
      %v1301 = vshrl.u32 %v1300, 7
      %v1302 = vsub.s32 %v947, %v1301
      %v1303 = vrot.slane %v1185, %v1302
      %v1304 = vlaneseq
      %v1305 = vshrl.u32 %v1304, 7
      %v1306 = vsub.s32 %v947, %v1305
      %v1307 = vrot.slane %v1188, %v1306
      %v1308 = vlaneseq
      %v1309 = vshrl.u32 %v1308, 7
      %v1310 = vsub.s32 %v947, %v1309
      %v1311 = vrot.slane %v1191, %v1310
      %v1312 = vlaneseq
      %v1313 = vshrl.u32 %v1312, 7
      %v1314 = vsub.s32 %v947, %v1313
      %v1315 = vrot.slane %v1194, %v1314
      %v1316 = vlaneseq
      %v1317 = vshrl.u32 %v1316, 7
      %v1318 = vsub.s32 %v947, %v1317
      %v1319 = vrot.slane %v1197, %v1318
      %v1320 = vlaneseq
      %v1321 = vshrl.u32 %v1320, 7
      %v1322 = vsub.s32 %v947, %v1321
      %v1323 = vrot.slane %v1200, %v1322
      %v1324 = vlaneseq
      %v1325 = vshrl.u32 %v1324, 7
      %v1326 = vsub.s32 %v947, %v1325
      %v1327 = vrot.slane %v1203, %v1326
      %v1328 = vlaneseq
      %v1329 = vshrl.u32 %v1328, 7
      %v1330 = vsub.s32 %v947, %v1329
      %v1331 = vrot.slane %v1206, %v1330
      %v1332 = vlaneseq
      %v1333 = vshrl.u32 %v1332, 7
      %v1334 = vsub.s32 %v947, %v1333
      %v1335 = vrot.slane %v1209, %v1334
      %v1336 = vlaneseq
      %v1337 = vshrl.u32 %v1336, 7
      %v1338 = vsub.s32 %v947, %v1337
      %v1339 = vrot.slane %v1212, %v1338
      %v1340 = vlaneseq
      %v1341 = vshrl.u32 %v1340, 7
      %v1342 = vsub.s32 %v947, %v1341
      %v1343 = vrot.slane %v1215, %v1342
      %v1344 = vsel %vm1076, %v1223, %v1219
      %v1345 = vsel %vm1078, %v1227, %v1344
      %v1346 = vsel %vm1080, %v1231, %v1345
      %v1347 = vsel %vm1082, %v1235, %v1346
      %v1348 = vsel %vm1084, %v1239, %v1347
      %v1349 = vsel %vm1086, %v1243, %v1348
      %v1350 = vsel %vm1088, %v1247, %v1349
      %v1351 = vsel %vm1076, %v1255, %v1251
      %v1352 = vsel %vm1078, %v1259, %v1351
      %v1353 = vsel %vm1080, %v1263, %v1352
      %v1354 = vsel %vm1082, %v1267, %v1353
      %v1355 = vsel %vm1084, %v1271, %v1354
      %v1356 = vsel %vm1086, %v1275, %v1355
      %v1357 = vsel %vm1088, %v1279, %v1356
      %v1358 = vsel %vm1076, %v1287, %v1283
      %v1359 = vsel %vm1078, %v1291, %v1358
      %v1360 = vsel %vm1080, %v1295, %v1359
      %v1361 = vsel %vm1082, %v1299, %v1360
      %v1362 = vsel %vm1084, %v1303, %v1361
      %v1363 = vsel %vm1086, %v1307, %v1362
      %v1364 = vsel %vm1088, %v1311, %v1363
      %v1365 = vsel %vm1076, %v1319, %v1315
      %v1366 = vsel %vm1078, %v1323, %v1365
      %v1367 = vsel %vm1080, %v1327, %v1366
      %v1368 = vsel %vm1082, %v1331, %v1367
      %v1369 = vsel %vm1084, %v1335, %v1368
      %v1370 = vsel %vm1086, %v1339, %v1369
      %v1371 = vsel %vm1088, %v1343, %v1370
      %s1376 = scalar_lea.vmem %s180, 32
      %1377 = vst.msk [vmem:[%s1376] sm:$0xff] %vm1115, %v1350
      %1378 = vst.msk [vmem:[%s1376 + $0x8] sm:$0xff] %vm1115, %v1357
      %1379 = vst.msk [vmem:[%s1376 + $0x10] sm:$0xff] %vm1115, %v1364
      %1380 = vst.msk [vmem:[%s1376 + $0x18] sm:$0xff] %vm1115, %v1371
      %v1381 = vld [vmem:[%s167] sm:$0xff]
      %v1382 = vld [vmem:[%s167 + $0x8] sm:$0xff]
      %v1383 = vld [vmem:[%s167 + $0x10] sm:$0xff]
      %v1384 = vld [vmem:[%s167 + $0x18] sm:$0xff]
      %1389 = vrot.lane.b32.xlu0 %v1381, 126
      %v1390 = vpop.permute.xlu0 %1389
      %1391 = vrot.lane.b32.xlu0 %v1382, 126
      %v1392 = vpop.permute.xlu0 %1391
      %1393 = vrot.lane.b32.xlu0 %v1383, 126
      %v1394 = vpop.permute.xlu0 %1393
      %1395 = vrot.lane.b32.xlu0 %v1384, 126
      %v1396 = vpop.permute.xlu0 %1395
      %1397 = vrot.lane.b32.xlu0 %v1381, 124
      %v1398 = vpop.permute.xlu0 %1397
      %1399 = vrot.lane.b32.xlu0 %v1382, 124
      %v1400 = vpop.permute.xlu0 %1399
      %1401 = vrot.lane.b32.xlu0 %v1383, 124
      %v1402 = vpop.permute.xlu0 %1401
      %1403 = vrot.lane.b32.xlu0 %v1384, 124
      %v1404 = vpop.permute.xlu0 %1403
      %1405 = vrot.lane.b32.xlu0 %v1381, 122
      %v1406 = vpop.permute.xlu0 %1405
      %1407 = vrot.lane.b32.xlu0 %v1382, 122
      %v1408 = vpop.permute.xlu0 %1407
      %1409 = vrot.lane.b32.xlu0 %v1383, 122
      %v1410 = vpop.permute.xlu0 %1409
      %1411 = vrot.lane.b32.xlu0 %v1384, 122
      %v1412 = vpop.permute.xlu0 %1411
      %1413 = vrot.lane.b32.xlu0 %v1381, 120
      %v1414 = vpop.permute.xlu0 %1413
      %1415 = vrot.lane.b32.xlu0 %v1382, 120
      %v1416 = vpop.permute.xlu0 %1415
      %1417 = vrot.lane.b32.xlu0 %v1383, 120
      %v1418 = vpop.permute.xlu0 %1417
      %1419 = vrot.lane.b32.xlu0 %v1384, 120
      %v1420 = vpop.permute.xlu0 %1419
      %1421 = vrot.lane.b32.xlu0 %v1381, 118
      %v1422 = vpop.permute.xlu0 %1421
      %1423 = vrot.lane.b32.xlu0 %v1382, 118
      %v1424 = vpop.permute.xlu0 %1423
      %1425 = vrot.lane.b32.xlu0 %v1383, 118
      %v1426 = vpop.permute.xlu0 %1425
      %1427 = vrot.lane.b32.xlu0 %v1384, 118
      %v1428 = vpop.permute.xlu0 %1427
      %1429 = vrot.lane.b32.xlu0 %v1381, 116
      %v1430 = vpop.permute.xlu0 %1429
      %1431 = vrot.lane.b32.xlu0 %v1382, 116
      %v1432 = vpop.permute.xlu0 %1431
      %1433 = vrot.lane.b32.xlu0 %v1383, 116
      %v1434 = vpop.permute.xlu0 %1433
      %1435 = vrot.lane.b32.xlu0 %v1384, 116
      %v1436 = vpop.permute.xlu0 %1435
      %1437 = vrot.lane.b32.xlu0 %v1381, 114
      %v1438 = vpop.permute.xlu0 %1437
      %1439 = vrot.lane.b32.xlu0 %v1382, 114
      %v1440 = vpop.permute.xlu0 %1439
      %1441 = vrot.lane.b32.xlu0 %v1383, 114
      %v1442 = vpop.permute.xlu0 %1441
      %1443 = vrot.lane.b32.xlu0 %v1384, 114
      %v1444 = vpop.permute.xlu0 %1443
      %1445 = vrot.lane.b32.xlu0 %v1381, 112
      %v1446 = vpop.permute.xlu0 %1445
      %1447 = vrot.lane.b32.xlu0 %v1390, 112
      %v1448 = vpop.permute.xlu0 %1447
      %1449 = vrot.lane.b32.xlu0 %v1398, 112
      %v1450 = vpop.permute.xlu0 %1449
      %1451 = vrot.lane.b32.xlu0 %v1406, 112
      %v1452 = vpop.permute.xlu0 %1451
      %1453 = vrot.lane.b32.xlu0 %v1414, 112
      %v1454 = vpop.permute.xlu0 %1453
      %1455 = vrot.lane.b32.xlu0 %v1422, 112
      %v1456 = vpop.permute.xlu0 %1455
      %1457 = vrot.lane.b32.xlu0 %v1430, 112
      %v1458 = vpop.permute.xlu0 %1457
      %1459 = vrot.lane.b32.xlu0 %v1438, 112
      %v1460 = vpop.permute.xlu0 %1459
      %1461 = vrot.lane.b32.xlu0 %v1382, 112
      %v1462 = vpop.permute.xlu0 %1461
      %1463 = vrot.lane.b32.xlu0 %v1392, 112
      %v1464 = vpop.permute.xlu0 %1463
      %1465 = vrot.lane.b32.xlu0 %v1400, 112
      %v1466 = vpop.permute.xlu0 %1465
      %1467 = vrot.lane.b32.xlu0 %v1408, 112
      %v1468 = vpop.permute.xlu0 %1467
      %1469 = vrot.lane.b32.xlu0 %v1416, 112
      %v1470 = vpop.permute.xlu0 %1469
      %1471 = vrot.lane.b32.xlu0 %v1424, 112
      %v1472 = vpop.permute.xlu0 %1471
      %1473 = vrot.lane.b32.xlu0 %v1432, 112
      %v1474 = vpop.permute.xlu0 %1473
      %1475 = vrot.lane.b32.xlu0 %v1440, 112
      %v1476 = vpop.permute.xlu0 %1475
      %1477 = vrot.lane.b32.xlu0 %v1383, 112
      %v1478 = vpop.permute.xlu0 %1477
      %1479 = vrot.lane.b32.xlu0 %v1394, 112
      %v1480 = vpop.permute.xlu0 %1479
      %1481 = vrot.lane.b32.xlu0 %v1402, 112
      %v1482 = vpop.permute.xlu0 %1481
      %1483 = vrot.lane.b32.xlu0 %v1410, 112
      %v1484 = vpop.permute.xlu0 %1483
      %1485 = vrot.lane.b32.xlu0 %v1418, 112
      %v1486 = vpop.permute.xlu0 %1485
      %1487 = vrot.lane.b32.xlu0 %v1426, 112
      %v1488 = vpop.permute.xlu0 %1487
      %1489 = vrot.lane.b32.xlu0 %v1434, 112
      %v1490 = vpop.permute.xlu0 %1489
      %1491 = vrot.lane.b32.xlu0 %v1442, 112
      %v1492 = vpop.permute.xlu0 %1491
      %1493 = vrot.lane.b32.xlu0 %v1384, 112
      %v1494 = vpop.permute.xlu0 %1493
      %1495 = vrot.lane.b32.xlu0 %v1396, 112
      %v1496 = vpop.permute.xlu0 %1495
      %1497 = vrot.lane.b32.xlu0 %v1404, 112
      %v1498 = vpop.permute.xlu0 %1497
      %1499 = vrot.lane.b32.xlu0 %v1412, 112
      %v1500 = vpop.permute.xlu0 %1499
      %1501 = vrot.lane.b32.xlu0 %v1420, 112
      %v1502 = vpop.permute.xlu0 %1501
      %1503 = vrot.lane.b32.xlu0 %v1428, 112
      %v1504 = vpop.permute.xlu0 %1503
      %1505 = vrot.lane.b32.xlu0 %v1436, 112
      %v1506 = vpop.permute.xlu0 %1505
      %1507 = vrot.lane.b32.xlu0 %v1444, 112
      %v1508 = vpop.permute.xlu0 %1507
      %v1541 = vcombine.low %v1446, %v1450
      %v1542 = vcombine.high %v1446, %v1450
      %v1544 = vunpack.c.l.s4 1983009808
      %v1545 = vunpack.c.0.s8 %v1544
      %v1546 = vlaneseq
      %v1547 = vshrl.u32 %v1546, 7
      %v1548 = vsub.s32 %v1545, %v1547
      %v1549 = vrot.slane %v1541, %v1548
      %v1551 = vunpack.c.l.s4 1983009808
      %v1552 = vunpack.c.0.s8 %v1551
      %v1553 = vlaneseq
      %v1554 = vshrl.u32 %v1553, 7
      %v1555 = vsub.s32 %v1552, %v1554
      %v1556 = vrot.slane %v1542, %v1555
      %v1557 = vcombine.low %v1448, %v1452
      %v1558 = vcombine.high %v1448, %v1452
      %v1560 = vunpack.c.l.s4 1983009808
      %v1561 = vunpack.c.0.s8 %v1560
      %v1562 = vlaneseq
      %v1563 = vshrl.u32 %v1562, 7
      %v1564 = vsub.s32 %v1561, %v1563
      %v1565 = vrot.slane %v1557, %v1564
      %v1567 = vunpack.c.l.s4 1983009808
      %v1568 = vunpack.c.0.s8 %v1567
      %v1569 = vlaneseq
      %v1570 = vshrl.u32 %v1569, 7
      %v1571 = vsub.s32 %v1568, %v1570
      %v1572 = vrot.slane %v1558, %v1571
      %v1573 = vcombine.low %v1454, %v1458
      %v1574 = vcombine.high %v1454, %v1458
      %v1576 = vunpack.c.l.s4 1983009808
      %v1577 = vunpack.c.0.s8 %v1576
      %v1578 = vlaneseq
      %v1579 = vshrl.u32 %v1578, 7
      %v1580 = vsub.s32 %v1577, %v1579
      %v1581 = vrot.slane %v1573, %v1580
      %v1583 = vunpack.c.l.s4 1983009808
      %v1584 = vunpack.c.0.s8 %v1583
      %v1585 = vlaneseq
      %v1586 = vshrl.u32 %v1585, 7
      %v1587 = vsub.s32 %v1584, %v1586
      %v1588 = vrot.slane %v1574, %v1587
      %v1589 = vcombine.low %v1456, %v1460
      %v1590 = vcombine.high %v1456, %v1460
      %v1592 = vunpack.c.l.s4 1983009808
      %v1593 = vunpack.c.0.s8 %v1592
      %v1594 = vlaneseq
      %v1595 = vshrl.u32 %v1594, 7
      %v1596 = vsub.s32 %v1593, %v1595
      %v1597 = vrot.slane %v1589, %v1596
      %v1599 = vunpack.c.l.s4 1983009808
      %v1600 = vunpack.c.0.s8 %v1599
      %v1601 = vlaneseq
      %v1602 = vshrl.u32 %v1601, 7
      %v1603 = vsub.s32 %v1600, %v1602
      %v1604 = vrot.slane %v1590, %v1603
      %v1605 = vcombine.low %v1549, %v1565
      %v1606 = vcombine.high %v1549, %v1565
      %v1608 = vunpack.c.l.s4 1934713408
      %v1609 = vunpack.c.0.s8 %v1608
      %v1610 = vlaneseq
      %v1611 = vshrl.u32 %v1610, 7
      %v1612 = vsub.s32 %v1609, %v1611
      %v1613 = vrot.slane %v1605, %v1612
      %v1615 = vunpack.c.l.s4 1934713408
      %v1616 = vunpack.c.0.s8 %v1615
      %v1617 = vlaneseq
      %v1618 = vshrl.u32 %v1617, 7
      %v1619 = vsub.s32 %v1616, %v1618
      %v1620 = vrot.slane %v1606, %v1619
      %v1621 = vcombine.low %v1556, %v1572
      %v1622 = vcombine.high %v1556, %v1572
      %v1624 = vunpack.c.l.s4 1934713408
      %v1625 = vunpack.c.0.s8 %v1624
      %v1626 = vlaneseq
      %v1627 = vshrl.u32 %v1626, 7
      %v1628 = vsub.s32 %v1625, %v1627
      %v1629 = vrot.slane %v1621, %v1628
      %v1631 = vunpack.c.l.s4 1934713408
      %v1632 = vunpack.c.0.s8 %v1631
      %v1633 = vlaneseq
      %v1634 = vshrl.u32 %v1633, 7
      %v1635 = vsub.s32 %v1632, %v1634
      %v1636 = vrot.slane %v1622, %v1635
      %v1637 = vcombine.low %v1581, %v1597
      %v1638 = vcombine.high %v1581, %v1597
      %v1640 = vunpack.c.l.s4 1934713408
      %v1641 = vunpack.c.0.s8 %v1640
      %v1642 = vlaneseq
      %v1643 = vshrl.u32 %v1642, 7
      %v1644 = vsub.s32 %v1641, %v1643
      %v1645 = vrot.slane %v1637, %v1644
      %v1647 = vunpack.c.l.s4 1934713408
      %v1648 = vunpack.c.0.s8 %v1647
      %v1649 = vlaneseq
      %v1650 = vshrl.u32 %v1649, 7
      %v1651 = vsub.s32 %v1648, %v1650
      %v1652 = vrot.slane %v1638, %v1651
      %v1653 = vcombine.low %v1588, %v1604
      %v1654 = vcombine.high %v1588, %v1604
      %v1656 = vunpack.c.l.s4 1934713408
      %v1657 = vunpack.c.0.s8 %v1656
      %v1658 = vlaneseq
      %v1659 = vshrl.u32 %v1658, 7
      %v1660 = vsub.s32 %v1657, %v1659
      %v1661 = vrot.slane %v1653, %v1660
      %v1663 = vunpack.c.l.s4 1934713408
      %v1664 = vunpack.c.0.s8 %v1663
      %v1665 = vlaneseq
      %v1666 = vshrl.u32 %v1665, 7
      %v1667 = vsub.s32 %v1664, %v1666
      %v1668 = vrot.slane %v1654, %v1667
      %v1669 = vcombine.low %v1613, %v1645
      %v1670 = vcombine.high %v1613, %v1645
      %v1671 = vcombine.low %v1620, %v1652
      %v1672 = vcombine.high %v1620, %v1652
      %v1673 = vcombine.low %v1629, %v1661
      %v1674 = vcombine.high %v1629, %v1661
      %v1675 = vcombine.low %v1636, %v1668
      %v1676 = vcombine.high %v1636, %v1668
      %v1677 = vcombine.low %v1462, %v1466
      %v1678 = vcombine.high %v1462, %v1466
      %v1680 = vunpack.c.l.s4 1983009808
      %v1681 = vunpack.c.0.s8 %v1680
      %v1682 = vlaneseq
      %v1683 = vshrl.u32 %v1682, 7
      %v1684 = vsub.s32 %v1681, %v1683
      %v1685 = vrot.slane %v1677, %v1684
      %v1687 = vunpack.c.l.s4 1983009808
      %v1688 = vunpack.c.0.s8 %v1687
      %v1689 = vlaneseq
      %v1690 = vshrl.u32 %v1689, 7
      %v1691 = vsub.s32 %v1688, %v1690
      %v1692 = vrot.slane %v1678, %v1691
      %v1693 = vcombine.low %v1464, %v1468
      %v1694 = vcombine.high %v1464, %v1468
      %v1696 = vunpack.c.l.s4 1983009808
      %v1697 = vunpack.c.0.s8 %v1696
      %v1698 = vlaneseq
      %v1699 = vshrl.u32 %v1698, 7
      %v1700 = vsub.s32 %v1697, %v1699
      %v1701 = vrot.slane %v1693, %v1700
      %v1703 = vunpack.c.l.s4 1983009808
      %v1704 = vunpack.c.0.s8 %v1703
      %v1705 = vlaneseq
      %v1706 = vshrl.u32 %v1705, 7
      %v1707 = vsub.s32 %v1704, %v1706
      %v1708 = vrot.slane %v1694, %v1707
      %v1709 = vcombine.low %v1470, %v1474
      %v1710 = vcombine.high %v1470, %v1474
      %v1712 = vunpack.c.l.s4 1983009808
      %v1713 = vunpack.c.0.s8 %v1712
      %v1714 = vlaneseq
      %v1715 = vshrl.u32 %v1714, 7
      %v1716 = vsub.s32 %v1713, %v1715
      %v1717 = vrot.slane %v1709, %v1716
      %v1719 = vunpack.c.l.s4 1983009808
      %v1720 = vunpack.c.0.s8 %v1719
      %v1721 = vlaneseq
      %v1722 = vshrl.u32 %v1721, 7
      %v1723 = vsub.s32 %v1720, %v1722
      %v1724 = vrot.slane %v1710, %v1723
      %v1725 = vcombine.low %v1472, %v1476
      %v1726 = vcombine.high %v1472, %v1476
      %v1728 = vunpack.c.l.s4 1983009808
      %v1729 = vunpack.c.0.s8 %v1728
      %v1730 = vlaneseq
      %v1731 = vshrl.u32 %v1730, 7
      %v1732 = vsub.s32 %v1729, %v1731
      %v1733 = vrot.slane %v1725, %v1732
      %v1735 = vunpack.c.l.s4 1983009808
      %v1736 = vunpack.c.0.s8 %v1735
      %v1737 = vlaneseq
      %v1738 = vshrl.u32 %v1737, 7
      %v1739 = vsub.s32 %v1736, %v1738
      %v1740 = vrot.slane %v1726, %v1739
      %v1741 = vcombine.low %v1685, %v1701
      %v1742 = vcombine.high %v1685, %v1701
      %v1744 = vunpack.c.l.s4 1934713408
      %v1745 = vunpack.c.0.s8 %v1744
      %v1746 = vlaneseq
      %v1747 = vshrl.u32 %v1746, 7
      %v1748 = vsub.s32 %v1745, %v1747
      %v1749 = vrot.slane %v1741, %v1748
      %v1751 = vunpack.c.l.s4 1934713408
      %v1752 = vunpack.c.0.s8 %v1751
      %v1753 = vlaneseq
      %v1754 = vshrl.u32 %v1753, 7
      %v1755 = vsub.s32 %v1752, %v1754
      %v1756 = vrot.slane %v1742, %v1755
      %v1757 = vcombine.low %v1692, %v1708
      %v1758 = vcombine.high %v1692, %v1708
      %v1760 = vunpack.c.l.s4 1934713408
      %v1761 = vunpack.c.0.s8 %v1760
      %v1762 = vlaneseq
      %v1763 = vshrl.u32 %v1762, 7
      %v1764 = vsub.s32 %v1761, %v1763
      %v1765 = vrot.slane %v1757, %v1764
      %v1767 = vunpack.c.l.s4 1934713408
      %v1768 = vunpack.c.0.s8 %v1767
      %v1769 = vlaneseq
      %v1770 = vshrl.u32 %v1769, 7
      %v1771 = vsub.s32 %v1768, %v1770
      %v1772 = vrot.slane %v1758, %v1771
      %v1773 = vcombine.low %v1717, %v1733
      %v1774 = vcombine.high %v1717, %v1733
      %v1776 = vunpack.c.l.s4 1934713408
      %v1777 = vunpack.c.0.s8 %v1776
      %v1778 = vlaneseq
      %v1779 = vshrl.u32 %v1778, 7
      %v1780 = vsub.s32 %v1777, %v1779
      %v1781 = vrot.slane %v1773, %v1780
      %v1783 = vunpack.c.l.s4 1934713408
      %v1784 = vunpack.c.0.s8 %v1783
      %v1785 = vlaneseq
      %v1786 = vshrl.u32 %v1785, 7
      %v1787 = vsub.s32 %v1784, %v1786
      %v1788 = vrot.slane %v1774, %v1787
      %v1789 = vcombine.low %v1724, %v1740
      %v1790 = vcombine.high %v1724, %v1740
      %v1792 = vunpack.c.l.s4 1934713408
      %v1793 = vunpack.c.0.s8 %v1792
      %v1794 = vlaneseq
      %v1795 = vshrl.u32 %v1794, 7
      %v1796 = vsub.s32 %v1793, %v1795
      %v1797 = vrot.slane %v1789, %v1796
      %v1799 = vunpack.c.l.s4 1934713408
      %v1800 = vunpack.c.0.s8 %v1799
      %v1801 = vlaneseq
      %v1802 = vshrl.u32 %v1801, 7
      %v1803 = vsub.s32 %v1800, %v1802
      %v1804 = vrot.slane %v1790, %v1803
      %v1805 = vcombine.low %v1749, %v1781
      %v1806 = vcombine.high %v1749, %v1781
      %v1807 = vcombine.low %v1756, %v1788
      %v1808 = vcombine.high %v1756, %v1788
      %v1809 = vcombine.low %v1765, %v1797
      %v1810 = vcombine.high %v1765, %v1797
      %v1811 = vcombine.low %v1772, %v1804
      %v1812 = vcombine.high %v1772, %v1804
      %v1813 = vcombine.low %v1478, %v1482
      %v1814 = vcombine.high %v1478, %v1482
      %v1816 = vunpack.c.l.s4 1983009808
      %v1817 = vunpack.c.0.s8 %v1816
      %v1818 = vlaneseq
      %v1819 = vshrl.u32 %v1818, 7
      %v1820 = vsub.s32 %v1817, %v1819
      %v1821 = vrot.slane %v1813, %v1820
      %v1823 = vunpack.c.l.s4 1983009808
      %v1824 = vunpack.c.0.s8 %v1823
      %v1825 = vlaneseq
      %v1826 = vshrl.u32 %v1825, 7
      %v1827 = vsub.s32 %v1824, %v1826
      %v1828 = vrot.slane %v1814, %v1827
      %v1829 = vcombine.low %v1480, %v1484
      %v1830 = vcombine.high %v1480, %v1484
      %v1832 = vunpack.c.l.s4 1983009808
      %v1833 = vunpack.c.0.s8 %v1832
      %v1834 = vlaneseq
      %v1835 = vshrl.u32 %v1834, 7
      %v1836 = vsub.s32 %v1833, %v1835
      %v1837 = vrot.slane %v1829, %v1836
      %v1839 = vunpack.c.l.s4 1983009808
      %v1840 = vunpack.c.0.s8 %v1839
      %v1841 = vlaneseq
      %v1842 = vshrl.u32 %v1841, 7
      %v1843 = vsub.s32 %v1840, %v1842
      %v1844 = vrot.slane %v1830, %v1843
      %v1845 = vcombine.low %v1486, %v1490
      %v1846 = vcombine.high %v1486, %v1490
      %v1848 = vunpack.c.l.s4 1983009808
      %v1849 = vunpack.c.0.s8 %v1848
      %v1850 = vlaneseq
      %v1851 = vshrl.u32 %v1850, 7
      %v1852 = vsub.s32 %v1849, %v1851
      %v1853 = vrot.slane %v1845, %v1852
      %v1855 = vunpack.c.l.s4 1983009808
      %v1856 = vunpack.c.0.s8 %v1855
      %v1857 = vlaneseq
      %v1858 = vshrl.u32 %v1857, 7
      %v1859 = vsub.s32 %v1856, %v1858
      %v1860 = vrot.slane %v1846, %v1859
      %v1861 = vcombine.low %v1488, %v1492
      %v1862 = vcombine.high %v1488, %v1492
      %v1864 = vunpack.c.l.s4 1983009808
      %v1865 = vunpack.c.0.s8 %v1864
      %v1866 = vlaneseq
      %v1867 = vshrl.u32 %v1866, 7
      %v1868 = vsub.s32 %v1865, %v1867
      %v1869 = vrot.slane %v1861, %v1868
      %v1871 = vunpack.c.l.s4 1983009808
      %v1872 = vunpack.c.0.s8 %v1871
      %v1873 = vlaneseq
      %v1874 = vshrl.u32 %v1873, 7
      %v1875 = vsub.s32 %v1872, %v1874
      %v1876 = vrot.slane %v1862, %v1875
      %v1877 = vcombine.low %v1821, %v1837
      %v1878 = vcombine.high %v1821, %v1837
      %v1880 = vunpack.c.l.s4 1934713408
      %v1881 = vunpack.c.0.s8 %v1880
      %v1882 = vlaneseq
      %v1883 = vshrl.u32 %v1882, 7
      %v1884 = vsub.s32 %v1881, %v1883
      %v1885 = vrot.slane %v1877, %v1884
      %v1887 = vunpack.c.l.s4 1934713408
      %v1888 = vunpack.c.0.s8 %v1887
      %v1889 = vlaneseq
      %v1890 = vshrl.u32 %v1889, 7
      %v1891 = vsub.s32 %v1888, %v1890
      %v1892 = vrot.slane %v1878, %v1891
      %v1893 = vcombine.low %v1828, %v1844
      %v1894 = vcombine.high %v1828, %v1844
      %v1896 = vunpack.c.l.s4 1934713408
      %v1897 = vunpack.c.0.s8 %v1896
      %v1898 = vlaneseq
      %v1899 = vshrl.u32 %v1898, 7
      %v1900 = vsub.s32 %v1897, %v1899
      %v1901 = vrot.slane %v1893, %v1900
      %v1903 = vunpack.c.l.s4 1934713408
      %v1904 = vunpack.c.0.s8 %v1903
      %v1905 = vlaneseq
      %v1906 = vshrl.u32 %v1905, 7
      %v1907 = vsub.s32 %v1904, %v1906
      %v1908 = vrot.slane %v1894, %v1907
      %v1909 = vcombine.low %v1853, %v1869
      %v1910 = vcombine.high %v1853, %v1869
      %v1912 = vunpack.c.l.s4 1934713408
      %v1913 = vunpack.c.0.s8 %v1912
      %v1914 = vlaneseq
      %v1915 = vshrl.u32 %v1914, 7
      %v1916 = vsub.s32 %v1913, %v1915
      %v1917 = vrot.slane %v1909, %v1916
      %v1919 = vunpack.c.l.s4 1934713408
      %v1920 = vunpack.c.0.s8 %v1919
      %v1921 = vlaneseq
      %v1922 = vshrl.u32 %v1921, 7
      %v1923 = vsub.s32 %v1920, %v1922
      %v1924 = vrot.slane %v1910, %v1923
      %v1925 = vcombine.low %v1860, %v1876
      %v1926 = vcombine.high %v1860, %v1876
      %v1928 = vunpack.c.l.s4 1934713408
      %v1929 = vunpack.c.0.s8 %v1928
      %v1930 = vlaneseq
      %v1931 = vshrl.u32 %v1930, 7
      %v1932 = vsub.s32 %v1929, %v1931
      %v1933 = vrot.slane %v1925, %v1932
      %v1935 = vunpack.c.l.s4 1934713408
      %v1936 = vunpack.c.0.s8 %v1935
      %v1937 = vlaneseq
      %v1938 = vshrl.u32 %v1937, 7
      %v1939 = vsub.s32 %v1936, %v1938
      %v1940 = vrot.slane %v1926, %v1939
      %v1941 = vcombine.low %v1885, %v1917
      %v1942 = vcombine.high %v1885, %v1917
      %v1943 = vcombine.low %v1892, %v1924
      %v1944 = vcombine.high %v1892, %v1924
      %v1945 = vcombine.low %v1901, %v1933
      %v1946 = vcombine.high %v1901, %v1933
      %v1947 = vcombine.low %v1908, %v1940
      %v1948 = vcombine.high %v1908, %v1940
      %v1949 = vcombine.low %v1494, %v1498
      %v1950 = vcombine.high %v1494, %v1498
      %v1952 = vunpack.c.l.s4 1983009808
      %v1953 = vunpack.c.0.s8 %v1952
      %v1954 = vlaneseq
      %v1955 = vshrl.u32 %v1954, 7
      %v1956 = vsub.s32 %v1953, %v1955
      %v1957 = vrot.slane %v1949, %v1956
      %v1959 = vunpack.c.l.s4 1983009808
      %v1960 = vunpack.c.0.s8 %v1959
      %v1961 = vlaneseq
      %v1962 = vshrl.u32 %v1961, 7
      %v1963 = vsub.s32 %v1960, %v1962
      %v1964 = vrot.slane %v1950, %v1963
      %v1965 = vcombine.low %v1496, %v1500
      %v1966 = vcombine.high %v1496, %v1500
      %v1968 = vunpack.c.l.s4 1983009808
      %v1969 = vunpack.c.0.s8 %v1968
      %v1970 = vlaneseq
      %v1971 = vshrl.u32 %v1970, 7
      %v1972 = vsub.s32 %v1969, %v1971
      %v1973 = vrot.slane %v1965, %v1972
      %v1975 = vunpack.c.l.s4 1983009808
      %v1976 = vunpack.c.0.s8 %v1975
      %v1977 = vlaneseq
      %v1978 = vshrl.u32 %v1977, 7
      %v1979 = vsub.s32 %v1976, %v1978
      %v1980 = vrot.slane %v1966, %v1979
      %v1981 = vcombine.low %v1502, %v1506
      %v1982 = vcombine.high %v1502, %v1506
      %v1984 = vunpack.c.l.s4 1983009808
      %v1985 = vunpack.c.0.s8 %v1984
      %v1986 = vlaneseq
      %v1987 = vshrl.u32 %v1986, 7
      %v1988 = vsub.s32 %v1985, %v1987
      %v1989 = vrot.slane %v1981, %v1988
      %v1991 = vunpack.c.l.s4 1983009808
      %v1992 = vunpack.c.0.s8 %v1991
      %v1993 = vlaneseq
      %v1994 = vshrl.u32 %v1993, 7
      %v1995 = vsub.s32 %v1992, %v1994
      %v1996 = vrot.slane %v1982, %v1995
      %v1997 = vcombine.low %v1504, %v1508
      %v1998 = vcombine.high %v1504, %v1508
      %v2000 = vunpack.c.l.s4 1983009808
      %v2001 = vunpack.c.0.s8 %v2000
      %v2002 = vlaneseq
      %v2003 = vshrl.u32 %v2002, 7
      %v2004 = vsub.s32 %v2001, %v2003
      %v2005 = vrot.slane %v1997, %v2004
      %v2007 = vunpack.c.l.s4 1983009808
      %v2008 = vunpack.c.0.s8 %v2007
      %v2009 = vlaneseq
      %v2010 = vshrl.u32 %v2009, 7
      %v2011 = vsub.s32 %v2008, %v2010
      %v2012 = vrot.slane %v1998, %v2011
      %v2013 = vcombine.low %v1957, %v1973
      %v2014 = vcombine.high %v1957, %v1973
      %v2016 = vunpack.c.l.s4 1934713408
      %v2017 = vunpack.c.0.s8 %v2016
      %v2018 = vlaneseq
      %v2019 = vshrl.u32 %v2018, 7
      %v2020 = vsub.s32 %v2017, %v2019
      %v2021 = vrot.slane %v2013, %v2020
      %v2023 = vunpack.c.l.s4 1934713408
      %v2024 = vunpack.c.0.s8 %v2023
      %v2025 = vlaneseq
      %v2026 = vshrl.u32 %v2025, 7
      %v2027 = vsub.s32 %v2024, %v2026
      %v2028 = vrot.slane %v2014, %v2027
      %v2029 = vcombine.low %v1964, %v1980
      %v2030 = vcombine.high %v1964, %v1980
      %v2032 = vunpack.c.l.s4 1934713408
      %v2033 = vunpack.c.0.s8 %v2032
      %v2034 = vlaneseq
      %v2035 = vshrl.u32 %v2034, 7
      %v2036 = vsub.s32 %v2033, %v2035
      %v2037 = vrot.slane %v2029, %v2036
      %v2039 = vunpack.c.l.s4 1934713408
      %v2040 = vunpack.c.0.s8 %v2039
      %v2041 = vlaneseq
      %v2042 = vshrl.u32 %v2041, 7
      %v2043 = vsub.s32 %v2040, %v2042
      %v2044 = vrot.slane %v2030, %v2043
      %v2045 = vcombine.low %v1989, %v2005
      %v2046 = vcombine.high %v1989, %v2005
      %v2048 = vunpack.c.l.s4 1934713408
      %v2049 = vunpack.c.0.s8 %v2048
      %v2050 = vlaneseq
      %v2051 = vshrl.u32 %v2050, 7
      %v2052 = vsub.s32 %v2049, %v2051
      %v2053 = vrot.slane %v2045, %v2052
      %v2055 = vunpack.c.l.s4 1934713408
      %v2056 = vunpack.c.0.s8 %v2055
      %v2057 = vlaneseq
      %v2058 = vshrl.u32 %v2057, 7
      %v2059 = vsub.s32 %v2056, %v2058
      %v2060 = vrot.slane %v2046, %v2059
      %v2061 = vcombine.low %v1996, %v2012
      %v2062 = vcombine.high %v1996, %v2012
      %v2064 = vunpack.c.l.s4 1934713408
      %v2065 = vunpack.c.0.s8 %v2064
      %v2066 = vlaneseq
      %v2067 = vshrl.u32 %v2066, 7
      %v2068 = vsub.s32 %v2065, %v2067
      %v2069 = vrot.slane %v2061, %v2068
      %v2071 = vunpack.c.l.s4 1934713408
      %v2072 = vunpack.c.0.s8 %v2071
      %v2073 = vlaneseq
      %v2074 = vshrl.u32 %v2073, 7
      %v2075 = vsub.s32 %v2072, %v2074
      %v2076 = vrot.slane %v2062, %v2075
      %v2077 = vcombine.low %v2021, %v2053
      %v2078 = vcombine.high %v2021, %v2053
      %v2079 = vcombine.low %v2028, %v2060
      %v2080 = vcombine.high %v2028, %v2060
      %v2081 = vcombine.low %v2037, %v2069
      %v2082 = vcombine.high %v2037, %v2069
      %v2083 = vcombine.low %v2044, %v2076
      %v2084 = vcombine.high %v2044, %v2076
      %2117 = vset.pattern.permute.xlu0 0
      %2118 = vperm.xlu0 %2117, %v1669
      %v2119 = vpop.permute.xlu0 %2118
      %2120 = vset.pattern.permute.xlu0 0
      %2121 = vperm.xlu0 %2120, %v1670
      %v2122 = vpop.permute.xlu0 %2121
      %2123 = vset.pattern.permute.xlu0 0
      %2124 = vperm.xlu0 %2123, %v1671
      %v2125 = vpop.permute.xlu0 %2124
      %2126 = vset.pattern.permute.xlu0 0
      %2127 = vperm.xlu0 %2126, %v1672
      %v2128 = vpop.permute.xlu0 %2127
      %2129 = vset.pattern.permute.xlu0 0
      %2130 = vperm.xlu0 %2129, %v1673
      %v2131 = vpop.permute.xlu0 %2130
      %2132 = vset.pattern.permute.xlu0 0
      %2133 = vperm.xlu0 %2132, %v1674
      %v2134 = vpop.permute.xlu0 %2133
      %2135 = vset.pattern.permute.xlu0 0
      %2136 = vperm.xlu0 %2135, %v1675
      %v2137 = vpop.permute.xlu0 %2136
      %2138 = vset.pattern.permute.xlu0 0
      %2139 = vperm.xlu0 %2138, %v1676
      %v2140 = vpop.permute.xlu0 %2139
      %2141 = vset.pattern.permute.xlu0 0
      %2142 = vperm.xlu0 %2141, %v1805
      %v2143 = vpop.permute.xlu0 %2142
      %2144 = vset.pattern.permute.xlu0 0
      %2145 = vperm.xlu0 %2144, %v1806
      %v2146 = vpop.permute.xlu0 %2145
      %2147 = vset.pattern.permute.xlu0 0
      %2148 = vperm.xlu0 %2147, %v1807
      %v2149 = vpop.permute.xlu0 %2148
      %2150 = vset.pattern.permute.xlu0 0
      %2151 = vperm.xlu0 %2150, %v1808
      %v2152 = vpop.permute.xlu0 %2151
      %2153 = vset.pattern.permute.xlu0 0
      %2154 = vperm.xlu0 %2153, %v1809
      %v2155 = vpop.permute.xlu0 %2154
      %2156 = vset.pattern.permute.xlu0 0
      %2157 = vperm.xlu0 %2156, %v1810
      %v2158 = vpop.permute.xlu0 %2157
      %2159 = vset.pattern.permute.xlu0 0
      %2160 = vperm.xlu0 %2159, %v1811
      %v2161 = vpop.permute.xlu0 %2160
      %2162 = vset.pattern.permute.xlu0 0
      %2163 = vperm.xlu0 %2162, %v1812
      %v2164 = vpop.permute.xlu0 %2163
      %2165 = vset.pattern.permute.xlu0 0
      %2166 = vperm.xlu0 %2165, %v1941
      %v2167 = vpop.permute.xlu0 %2166
      %2168 = vset.pattern.permute.xlu0 0
      %2169 = vperm.xlu0 %2168, %v1942
      %v2170 = vpop.permute.xlu0 %2169
      %2171 = vset.pattern.permute.xlu0 0
      %2172 = vperm.xlu0 %2171, %v1943
      %v2173 = vpop.permute.xlu0 %2172
      %2174 = vset.pattern.permute.xlu0 0
      %2175 = vperm.xlu0 %2174, %v1944
      %v2176 = vpop.permute.xlu0 %2175
      %2177 = vset.pattern.permute.xlu0 0
      %2178 = vperm.xlu0 %2177, %v1945
      %v2179 = vpop.permute.xlu0 %2178
      %2180 = vset.pattern.permute.xlu0 0
      %2181 = vperm.xlu0 %2180, %v1946
      %v2182 = vpop.permute.xlu0 %2181
      %2183 = vset.pattern.permute.xlu0 0
      %2184 = vperm.xlu0 %2183, %v1947
      %v2185 = vpop.permute.xlu0 %2184
      %2186 = vset.pattern.permute.xlu0 0
      %2187 = vperm.xlu0 %2186, %v1948
      %v2188 = vpop.permute.xlu0 %2187
      %2189 = vset.pattern.permute.xlu0 0
      %2190 = vperm.xlu0 %2189, %v2077
      %v2191 = vpop.permute.xlu0 %2190
      %2192 = vset.pattern.permute.xlu0 0
      %2193 = vperm.xlu0 %2192, %v2078
      %v2194 = vpop.permute.xlu0 %2193
      %2195 = vset.pattern.permute.xlu0 0
      %2196 = vperm.xlu0 %2195, %v2079
      %v2197 = vpop.permute.xlu0 %2196
      %2198 = vset.pattern.permute.xlu0 0
      %2199 = vperm.xlu0 %2198, %v2080
      %v2200 = vpop.permute.xlu0 %2199
      %2201 = vset.pattern.permute.xlu0 0
      %2202 = vperm.xlu0 %2201, %v2081
      %v2203 = vpop.permute.xlu0 %2202
      %2204 = vset.pattern.permute.xlu0 0
      %2205 = vperm.xlu0 %2204, %v2082
      %v2206 = vpop.permute.xlu0 %2205
      %2207 = vset.pattern.permute.xlu0 0
      %2208 = vperm.xlu0 %2207, %v2083
      %v2209 = vpop.permute.xlu0 %2208
      %2210 = vset.pattern.permute.xlu0 0
      %2211 = vperm.xlu0 %2210, %v2084
      %v2212 = vpop.permute.xlu0 %2211
      %v2213 = vlaneseq
      %v2214 = vshrl.u32 %v2213, 7
      %v2215 = vsub.s32 %v947, %v2214
      %v2216 = vrot.slane %v2119, %v2215
      %v2217 = vlaneseq
      %v2218 = vshrl.u32 %v2217, 7
      %v2219 = vsub.s32 %v947, %v2218
      %v2220 = vrot.slane %v2122, %v2219
      %v2221 = vlaneseq
      %v2222 = vshrl.u32 %v2221, 7
      %v2223 = vsub.s32 %v947, %v2222
      %v2224 = vrot.slane %v2125, %v2223
      %v2225 = vlaneseq
      %v2226 = vshrl.u32 %v2225, 7
      %v2227 = vsub.s32 %v947, %v2226
      %v2228 = vrot.slane %v2128, %v2227
      %v2229 = vlaneseq
      %v2230 = vshrl.u32 %v2229, 7
      %v2231 = vsub.s32 %v947, %v2230
      %v2232 = vrot.slane %v2131, %v2231
      %v2233 = vlaneseq
      %v2234 = vshrl.u32 %v2233, 7
      %v2235 = vsub.s32 %v947, %v2234
      %v2236 = vrot.slane %v2134, %v2235
      %v2237 = vlaneseq
      %v2238 = vshrl.u32 %v2237, 7
      %v2239 = vsub.s32 %v947, %v2238
      %v2240 = vrot.slane %v2137, %v2239
      %v2241 = vlaneseq
      %v2242 = vshrl.u32 %v2241, 7
      %v2243 = vsub.s32 %v947, %v2242
      %v2244 = vrot.slane %v2140, %v2243
      %v2245 = vlaneseq
      %v2246 = vshrl.u32 %v2245, 7
      %v2247 = vsub.s32 %v947, %v2246
      %v2248 = vrot.slane %v2143, %v2247
      %v2249 = vlaneseq
      %v2250 = vshrl.u32 %v2249, 7
      %v2251 = vsub.s32 %v947, %v2250
      %v2252 = vrot.slane %v2146, %v2251
      %v2253 = vlaneseq
      %v2254 = vshrl.u32 %v2253, 7
      %v2255 = vsub.s32 %v947, %v2254
      %v2256 = vrot.slane %v2149, %v2255
      %v2257 = vlaneseq
      %v2258 = vshrl.u32 %v2257, 7
      %v2259 = vsub.s32 %v947, %v2258
      %v2260 = vrot.slane %v2152, %v2259
      %v2261 = vlaneseq
      %v2262 = vshrl.u32 %v2261, 7
      %v2263 = vsub.s32 %v947, %v2262
      %v2264 = vrot.slane %v2155, %v2263
      %v2265 = vlaneseq
      %v2266 = vshrl.u32 %v2265, 7
      %v2267 = vsub.s32 %v947, %v2266
      %v2268 = vrot.slane %v2158, %v2267
      %v2269 = vlaneseq
      %v2270 = vshrl.u32 %v2269, 7
      %v2271 = vsub.s32 %v947, %v2270
      %v2272 = vrot.slane %v2161, %v2271
      %v2273 = vlaneseq
      %v2274 = vshrl.u32 %v2273, 7
      %v2275 = vsub.s32 %v947, %v2274
      %v2276 = vrot.slane %v2164, %v2275
      %v2277 = vlaneseq
      %v2278 = vshrl.u32 %v2277, 7
      %v2279 = vsub.s32 %v947, %v2278
      %v2280 = vrot.slane %v2167, %v2279
      %v2281 = vlaneseq
      %v2282 = vshrl.u32 %v2281, 7
      %v2283 = vsub.s32 %v947, %v2282
      %v2284 = vrot.slane %v2170, %v2283
      %v2285 = vlaneseq
      %v2286 = vshrl.u32 %v2285, 7
      %v2287 = vsub.s32 %v947, %v2286
      %v2288 = vrot.slane %v2173, %v2287
      %v2289 = vlaneseq
      %v2290 = vshrl.u32 %v2289, 7
      %v2291 = vsub.s32 %v947, %v2290
      %v2292 = vrot.slane %v2176, %v2291
      %v2293 = vlaneseq
      %v2294 = vshrl.u32 %v2293, 7
      %v2295 = vsub.s32 %v947, %v2294
      %v2296 = vrot.slane %v2179, %v2295
      %v2297 = vlaneseq
      %v2298 = vshrl.u32 %v2297, 7
      %v2299 = vsub.s32 %v947, %v2298
      %v2300 = vrot.slane %v2182, %v2299
      %v2301 = vlaneseq
      %v2302 = vshrl.u32 %v2301, 7
      %v2303 = vsub.s32 %v947, %v2302
      %v2304 = vrot.slane %v2185, %v2303
      %v2305 = vlaneseq
      %v2306 = vshrl.u32 %v2305, 7
      %v2307 = vsub.s32 %v947, %v2306
      %v2308 = vrot.slane %v2188, %v2307
      %v2309 = vlaneseq
      %v2310 = vshrl.u32 %v2309, 7
      %v2311 = vsub.s32 %v947, %v2310
      %v2312 = vrot.slane %v2191, %v2311
      %v2313 = vlaneseq
      %v2314 = vshrl.u32 %v2313, 7
      %v2315 = vsub.s32 %v947, %v2314
      %v2316 = vrot.slane %v2194, %v2315
      %v2317 = vlaneseq
      %v2318 = vshrl.u32 %v2317, 7
      %v2319 = vsub.s32 %v947, %v2318
      %v2320 = vrot.slane %v2197, %v2319
      %v2321 = vlaneseq
      %v2322 = vshrl.u32 %v2321, 7
      %v2323 = vsub.s32 %v947, %v2322
      %v2324 = vrot.slane %v2200, %v2323
      %v2325 = vlaneseq
      %v2326 = vshrl.u32 %v2325, 7
      %v2327 = vsub.s32 %v947, %v2326
      %v2328 = vrot.slane %v2203, %v2327
      %v2329 = vlaneseq
      %v2330 = vshrl.u32 %v2329, 7
      %v2331 = vsub.s32 %v947, %v2330
      %v2332 = vrot.slane %v2206, %v2331
      %v2333 = vlaneseq
      %v2334 = vshrl.u32 %v2333, 7
      %v2335 = vsub.s32 %v947, %v2334
      %v2336 = vrot.slane %v2209, %v2335
      %v2337 = vlaneseq
      %v2338 = vshrl.u32 %v2337, 7
      %v2339 = vsub.s32 %v947, %v2338
      %v2340 = vrot.slane %v2212, %v2339
      %v2341 = vsel %vm1076, %v2220, %v2216
      %v2342 = vsel %vm1078, %v2224, %v2341
      %v2343 = vsel %vm1080, %v2228, %v2342
      %v2344 = vsel %vm1082, %v2232, %v2343
      %v2345 = vsel %vm1084, %v2236, %v2344
      %v2346 = vsel %vm1086, %v2240, %v2345
      %v2347 = vsel %vm1088, %v2244, %v2346
      %v2348 = vsel %vm1076, %v2252, %v2248
      %v2349 = vsel %vm1078, %v2256, %v2348
      %v2350 = vsel %vm1080, %v2260, %v2349
      %v2351 = vsel %vm1082, %v2264, %v2350
      %v2352 = vsel %vm1084, %v2268, %v2351
      %v2353 = vsel %vm1086, %v2272, %v2352
      %v2354 = vsel %vm1088, %v2276, %v2353
      %v2355 = vsel %vm1076, %v2284, %v2280
      %v2356 = vsel %vm1078, %v2288, %v2355
      %v2357 = vsel %vm1080, %v2292, %v2356
      %v2358 = vsel %vm1082, %v2296, %v2357
      %v2359 = vsel %vm1084, %v2300, %v2358
      %v2360 = vsel %vm1086, %v2304, %v2359
      %v2361 = vsel %vm1088, %v2308, %v2360
      %v2362 = vsel %vm1076, %v2316, %v2312
      %v2363 = vsel %vm1078, %v2320, %v2362
      %v2364 = vsel %vm1080, %v2324, %v2363
      %v2365 = vsel %vm1082, %v2328, %v2364
      %v2366 = vsel %vm1084, %v2332, %v2365
      %v2367 = vsel %vm1086, %v2336, %v2366
      %v2368 = vsel %vm1088, %v2340, %v2367
      %s2373 = scalar_lea.vmem %s180, 64
      %2374 = vst.msk [vmem:[%s2373] sm:$0xff] %vm1115, %v2347
      %2375 = vst.msk [vmem:[%s2373 + $0x8] sm:$0xff] %vm1115, %v2354
      %2376 = vst.msk [vmem:[%s2373 + $0x10] sm:$0xff] %vm1115, %v2361
      %2377 = vst.msk [vmem:[%s2373 + $0x18] sm:$0xff] %vm1115, %v2368
      %2378 = vset.pattern.permute.xlu0 1
      %2379 = vperm.xlu0 %2378, %v1669
      %v2380 = vpop.permute.xlu0 %2379
      %2381 = vset.pattern.permute.xlu0 1
      %2382 = vperm.xlu0 %2381, %v1670
      %v2383 = vpop.permute.xlu0 %2382
      %2384 = vset.pattern.permute.xlu0 1
      %2385 = vperm.xlu0 %2384, %v1671
      %v2386 = vpop.permute.xlu0 %2385
      %2387 = vset.pattern.permute.xlu0 1
      %2388 = vperm.xlu0 %2387, %v1672
      %v2389 = vpop.permute.xlu0 %2388
      %2390 = vset.pattern.permute.xlu0 1
      %2391 = vperm.xlu0 %2390, %v1673
      %v2392 = vpop.permute.xlu0 %2391
      %2393 = vset.pattern.permute.xlu0 1
      %2394 = vperm.xlu0 %2393, %v1674
      %v2395 = vpop.permute.xlu0 %2394
      %2396 = vset.pattern.permute.xlu0 1
      %2397 = vperm.xlu0 %2396, %v1675
      %v2398 = vpop.permute.xlu0 %2397
      %2399 = vset.pattern.permute.xlu0 1
      %2400 = vperm.xlu0 %2399, %v1676
      %v2401 = vpop.permute.xlu0 %2400
      %2402 = vset.pattern.permute.xlu0 1
      %2403 = vperm.xlu0 %2402, %v1805
      %v2404 = vpop.permute.xlu0 %2403
      %2405 = vset.pattern.permute.xlu0 1
      %2406 = vperm.xlu0 %2405, %v1806
      %v2407 = vpop.permute.xlu0 %2406
      %2408 = vset.pattern.permute.xlu0 1
      %2409 = vperm.xlu0 %2408, %v1807
      %v2410 = vpop.permute.xlu0 %2409
      %2411 = vset.pattern.permute.xlu0 1
      %2412 = vperm.xlu0 %2411, %v1808
      %v2413 = vpop.permute.xlu0 %2412
      %2414 = vset.pattern.permute.xlu0 1
      %2415 = vperm.xlu0 %2414, %v1809
      %v2416 = vpop.permute.xlu0 %2415
      %2417 = vset.pattern.permute.xlu0 1
      %2418 = vperm.xlu0 %2417, %v1810
      %v2419 = vpop.permute.xlu0 %2418
      %2420 = vset.pattern.permute.xlu0 1
      %2421 = vperm.xlu0 %2420, %v1811
      %v2422 = vpop.permute.xlu0 %2421
      %2423 = vset.pattern.permute.xlu0 1
      %2424 = vperm.xlu0 %2423, %v1812
      %v2425 = vpop.permute.xlu0 %2424
      %2426 = vset.pattern.permute.xlu0 1
      %2427 = vperm.xlu0 %2426, %v1941
      %v2428 = vpop.permute.xlu0 %2427
      %2429 = vset.pattern.permute.xlu0 1
      %2430 = vperm.xlu0 %2429, %v1942
      %v2431 = vpop.permute.xlu0 %2430
      %2432 = vset.pattern.permute.xlu0 1
      %2433 = vperm.xlu0 %2432, %v1943
      %v2434 = vpop.permute.xlu0 %2433
      %2435 = vset.pattern.permute.xlu0 1
      %2436 = vperm.xlu0 %2435, %v1944
      %v2437 = vpop.permute.xlu0 %2436
      %2438 = vset.pattern.permute.xlu0 1
      %2439 = vperm.xlu0 %2438, %v1945
      %v2440 = vpop.permute.xlu0 %2439
      %2441 = vset.pattern.permute.xlu0 1
      %2442 = vperm.xlu0 %2441, %v1946
      %v2443 = vpop.permute.xlu0 %2442
      %2444 = vset.pattern.permute.xlu0 1
      %2445 = vperm.xlu0 %2444, %v1947
      %v2446 = vpop.permute.xlu0 %2445
      %2447 = vset.pattern.permute.xlu0 1
      %2448 = vperm.xlu0 %2447, %v1948
      %v2449 = vpop.permute.xlu0 %2448
      %2450 = vset.pattern.permute.xlu0 1
      %2451 = vperm.xlu0 %2450, %v2077
      %v2452 = vpop.permute.xlu0 %2451
      %2453 = vset.pattern.permute.xlu0 1
      %2454 = vperm.xlu0 %2453, %v2078
      %v2455 = vpop.permute.xlu0 %2454
      %2456 = vset.pattern.permute.xlu0 1
      %2457 = vperm.xlu0 %2456, %v2079
      %v2458 = vpop.permute.xlu0 %2457
      %2459 = vset.pattern.permute.xlu0 1
      %2460 = vperm.xlu0 %2459, %v2080
      %v2461 = vpop.permute.xlu0 %2460
      %2462 = vset.pattern.permute.xlu0 1
      %2463 = vperm.xlu0 %2462, %v2081
      %v2464 = vpop.permute.xlu0 %2463
      %2465 = vset.pattern.permute.xlu0 1
      %2466 = vperm.xlu0 %2465, %v2082
      %v2467 = vpop.permute.xlu0 %2466
      %2468 = vset.pattern.permute.xlu0 1
      %2469 = vperm.xlu0 %2468, %v2083
      %v2470 = vpop.permute.xlu0 %2469
      %2471 = vset.pattern.permute.xlu0 1
      %2472 = vperm.xlu0 %2471, %v2084
      %v2473 = vpop.permute.xlu0 %2472
      %v2474 = vlaneseq
      %v2475 = vshrl.u32 %v2474, 7
      %v2476 = vsub.s32 %v947, %v2475
      %v2477 = vrot.slane %v2380, %v2476
      %v2478 = vlaneseq
      %v2479 = vshrl.u32 %v2478, 7
      %v2480 = vsub.s32 %v947, %v2479
      %v2481 = vrot.slane %v2383, %v2480
      %v2482 = vlaneseq
      %v2483 = vshrl.u32 %v2482, 7
      %v2484 = vsub.s32 %v947, %v2483
      %v2485 = vrot.slane %v2386, %v2484
      %v2486 = vlaneseq
      %v2487 = vshrl.u32 %v2486, 7
      %v2488 = vsub.s32 %v947, %v2487
      %v2489 = vrot.slane %v2389, %v2488
      %v2490 = vlaneseq
      %v2491 = vshrl.u32 %v2490, 7
      %v2492 = vsub.s32 %v947, %v2491
      %v2493 = vrot.slane %v2392, %v2492
      %v2494 = vlaneseq
      %v2495 = vshrl.u32 %v2494, 7
      %v2496 = vsub.s32 %v947, %v2495
      %v2497 = vrot.slane %v2395, %v2496
      %v2498 = vlaneseq
      %v2499 = vshrl.u32 %v2498, 7
      %v2500 = vsub.s32 %v947, %v2499
      %v2501 = vrot.slane %v2398, %v2500
      %v2502 = vlaneseq
      %v2503 = vshrl.u32 %v2502, 7
      %v2504 = vsub.s32 %v947, %v2503
      %v2505 = vrot.slane %v2401, %v2504
      %v2506 = vlaneseq
      %v2507 = vshrl.u32 %v2506, 7
      %v2508 = vsub.s32 %v947, %v2507
      %v2509 = vrot.slane %v2404, %v2508
      %v2510 = vlaneseq
      %v2511 = vshrl.u32 %v2510, 7
      %v2512 = vsub.s32 %v947, %v2511
      %v2513 = vrot.slane %v2407, %v2512
      %v2514 = vlaneseq
      %v2515 = vshrl.u32 %v2514, 7
      %v2516 = vsub.s32 %v947, %v2515
      %v2517 = vrot.slane %v2410, %v2516
      %v2518 = vlaneseq
      %v2519 = vshrl.u32 %v2518, 7
      %v2520 = vsub.s32 %v947, %v2519
      %v2521 = vrot.slane %v2413, %v2520
      %v2522 = vlaneseq
      %v2523 = vshrl.u32 %v2522, 7
      %v2524 = vsub.s32 %v947, %v2523
      %v2525 = vrot.slane %v2416, %v2524
      %v2526 = vlaneseq
      %v2527 = vshrl.u32 %v2526, 7
      %v2528 = vsub.s32 %v947, %v2527
      %v2529 = vrot.slane %v2419, %v2528
      %v2530 = vlaneseq
      %v2531 = vshrl.u32 %v2530, 7
      %v2532 = vsub.s32 %v947, %v2531
      %v2533 = vrot.slane %v2422, %v2532
      %v2534 = vlaneseq
      %v2535 = vshrl.u32 %v2534, 7
      %v2536 = vsub.s32 %v947, %v2535
      %v2537 = vrot.slane %v2425, %v2536
      %v2538 = vlaneseq
      %v2539 = vshrl.u32 %v2538, 7
      %v2540 = vsub.s32 %v947, %v2539
      %v2541 = vrot.slane %v2428, %v2540
      %v2542 = vlaneseq
      %v2543 = vshrl.u32 %v2542, 7
      %v2544 = vsub.s32 %v947, %v2543
      %v2545 = vrot.slane %v2431, %v2544
      %v2546 = vlaneseq
      %v2547 = vshrl.u32 %v2546, 7
      %v2548 = vsub.s32 %v947, %v2547
      %v2549 = vrot.slane %v2434, %v2548
      %v2550 = vlaneseq
      %v2551 = vshrl.u32 %v2550, 7
      %v2552 = vsub.s32 %v947, %v2551
      %v2553 = vrot.slane %v2437, %v2552
      %v2554 = vlaneseq
      %v2555 = vshrl.u32 %v2554, 7
      %v2556 = vsub.s32 %v947, %v2555
      %v2557 = vrot.slane %v2440, %v2556
      %v2558 = vlaneseq
      %v2559 = vshrl.u32 %v2558, 7
      %v2560 = vsub.s32 %v947, %v2559
      %v2561 = vrot.slane %v2443, %v2560
      %v2562 = vlaneseq
      %v2563 = vshrl.u32 %v2562, 7
      %v2564 = vsub.s32 %v947, %v2563
      %v2565 = vrot.slane %v2446, %v2564
      %v2566 = vlaneseq
      %v2567 = vshrl.u32 %v2566, 7
      %v2568 = vsub.s32 %v947, %v2567
      %v2569 = vrot.slane %v2449, %v2568
      %v2570 = vlaneseq
      %v2571 = vshrl.u32 %v2570, 7
      %v2572 = vsub.s32 %v947, %v2571
      %v2573 = vrot.slane %v2452, %v2572
      %v2574 = vlaneseq
      %v2575 = vshrl.u32 %v2574, 7
      %v2576 = vsub.s32 %v947, %v2575
      %v2577 = vrot.slane %v2455, %v2576
      %v2578 = vlaneseq
      %v2579 = vshrl.u32 %v2578, 7
      %v2580 = vsub.s32 %v947, %v2579
      %v2581 = vrot.slane %v2458, %v2580
      %v2582 = vlaneseq
      %v2583 = vshrl.u32 %v2582, 7
      %v2584 = vsub.s32 %v947, %v2583
      %v2585 = vrot.slane %v2461, %v2584
      %v2586 = vlaneseq
      %v2587 = vshrl.u32 %v2586, 7
      %v2588 = vsub.s32 %v947, %v2587
      %v2589 = vrot.slane %v2464, %v2588
      %v2590 = vlaneseq
      %v2591 = vshrl.u32 %v2590, 7
      %v2592 = vsub.s32 %v947, %v2591
      %v2593 = vrot.slane %v2467, %v2592
      %v2594 = vlaneseq
      %v2595 = vshrl.u32 %v2594, 7
      %v2596 = vsub.s32 %v947, %v2595
      %v2597 = vrot.slane %v2470, %v2596
      %v2598 = vlaneseq
      %v2599 = vshrl.u32 %v2598, 7
      %v2600 = vsub.s32 %v947, %v2599
      %v2601 = vrot.slane %v2473, %v2600
      %v2602 = vsel %vm1076, %v2481, %v2477
      %v2603 = vsel %vm1078, %v2485, %v2602
      %v2604 = vsel %vm1080, %v2489, %v2603
      %v2605 = vsel %vm1082, %v2493, %v2604
      %v2606 = vsel %vm1084, %v2497, %v2605
      %v2607 = vsel %vm1086, %v2501, %v2606
      %v2608 = vsel %vm1088, %v2505, %v2607
      %v2609 = vsel %vm1076, %v2513, %v2509
      %v2610 = vsel %vm1078, %v2517, %v2609
      %v2611 = vsel %vm1080, %v2521, %v2610
      %v2612 = vsel %vm1082, %v2525, %v2611
      %v2613 = vsel %vm1084, %v2529, %v2612
      %v2614 = vsel %vm1086, %v2533, %v2613
      %v2615 = vsel %vm1088, %v2537, %v2614
      %v2616 = vsel %vm1076, %v2545, %v2541
      %v2617 = vsel %vm1078, %v2549, %v2616
      %v2618 = vsel %vm1080, %v2553, %v2617
      %v2619 = vsel %vm1082, %v2557, %v2618
      %v2620 = vsel %vm1084, %v2561, %v2619
      %v2621 = vsel %vm1086, %v2565, %v2620
      %v2622 = vsel %vm1088, %v2569, %v2621
      %v2623 = vsel %vm1076, %v2577, %v2573
      %v2624 = vsel %vm1078, %v2581, %v2623
      %v2625 = vsel %vm1080, %v2585, %v2624
      %v2626 = vsel %vm1082, %v2589, %v2625
      %v2627 = vsel %vm1084, %v2593, %v2626
      %v2628 = vsel %vm1086, %v2597, %v2627
      %v2629 = vsel %vm1088, %v2601, %v2628
      %s2634 = scalar_lea.vmem %s180, 96
      %2635 = vst.msk [vmem:[%s2634] sm:$0xff] %vm1115, %v2608
      %2636 = vst.msk [vmem:[%s2634 + $0x8] sm:$0xff] %vm1115, %v2615
      %2637 = vst.msk [vmem:[%s2634 + $0x10] sm:$0xff] %vm1115, %v2622
      %2638 = vst.msk [vmem:[%s2634 + $0x18] sm:$0xff] %vm1115, %v2629
      %s2639 = smul.u32 4, %s18
      %p2640 = scmp.lt.s32.totalorder %s17, 1
      %s2641 = scalar_select %p2640, %s17, 1
      %p2642 = scmp.lt.s32.totalorder %s2639, 3
      %s2643 = scalar_select %p2642, %s2639, 3
      %p2644 = scmp.lt.s32.totalorder %s19, 0
      %s2645 = scalar_select %p2644, %s19, 0
      %s2646 = sadd.s32 %s2645, %s2643
      %s2647 = smul.addr %s2641, 16
      %s2648 = sadd.s32 %s2646, %s2647
      %s2649 = smul.addr %s2648, 8
      %s2650 = scalar_lea.vmem %s1, %s2649
      // Predicated region
      $region25: #{_reorg_impl.1} parent=23 // pred_check
        %p2651 = pneg %p83
      $region26: #{_reorg_impl.1} parent=23 // pred_check_branch
        %2653 = sbr.rel (%p2651) target = $region28
      $region27: #{_reorg_impl.1} parent=23 // pred_region
        %s2654 = smul.u32 4, %s18
      $region28: #{_reorg_impl.1} parent=23 // pred_fallthru
        _
    $region24: #{_reorg_impl.1} parent=5 // pred_fallthru
      _
    %p2655 = scmp.le.s32.totalorder 2, %s7
    // Predicated region
    $region29: #{_reorg_impl.1} parent=5 // pred_check
      %p2656 = pneg %p2655
    $region30: #{_reorg_impl.1} parent=5 // pred_check_branch
      %2658 = sbr.rel (%p2656) target = $region32
    $region31: #{_reorg_impl.1} parent=5 // pred_region
      %s2659 = ssub.s32 %s7, 2
      // Predicated region
      $region33: #{_reorg_impl.1} parent=31 // pred_check
        %p2660 = pneg %p89
      $region34: #{_reorg_impl.1} parent=31 // pred_check_branch
        %2662 = sbr.rel (%p2660) target = $region36
      $region35: #{_reorg_impl.1} parent=31 // pred_region
        %s2663 = smul.u32 4, %s21
        %p2664 = scmp.lt.s32.totalorder %s20, 1
        %s2665 = scalar_select %p2664, %s20, 1
        %p2666 = scmp.lt.s32.totalorder %s2663, 3
        %s2667 = scalar_select %p2666, %s2663, 3
        %p2668 = scmp.lt.s32.totalorder %s22, 0
        %s2669 = scalar_select %p2668, %s22, 0
        %s2670 = sadd.s32 %s2669, %s2667
        %s2671 = smul.addr %s2665, 16
        %s2672 = sadd.s32 %s2670, %s2671
        %s2673 = smul.addr %s2672, 8
        %s2674 = scalar_lea.vmem %s1, %s2673
      $region36: #{_reorg_impl.1} parent=31 // pred_fallthru
        _
    $region32: #{_reorg_impl.1} parent=5 // pred_fallthru
      _
  $region6: #{_reorg_impl.1} parent=0 // loop_footer
    %s11 = sadd.s32 1, %s7
  $region7: #{_reorg_impl.1} parent=0 // loop_footer_branch
    %6 = sbr.rel target = $region3
  $region8: #{_reorg_impl.1} parent=0 // loop_exit
    _

</llo_original>
